<compile_context>
chip_gen: v6e
topology: v6e:2x2x1
jax: 0.10.0
libtpu: 0.0.40
codegen_flags: <defaults>
</compile_context>

<pallas_src>
import functools

import jax
import jax.numpy as jnp
from jax.experimental import pallas as pl
from jax.experimental.pallas import tpu as pltpu

LANE = 128  # TPU lane width; all contraction/output dims are padded to this.


def _round_up(x, m):
    return (x + m - 1) // m * m


def actor_kernel(obs_ref,
                 wt_ref, bt_ref, g_ref, beta_ref,      # trunk Linear + LayerNorm affine
                 w1_ref, b1_ref,                       # policy fc1
                 w2_ref, b2_ref,                       # policy fc2
                 w3_ref, b3_ref,                       # policy fc3 (lane-padded action head)
                 mu_ref,
                 *, inv_feature):
    f32 = jnp.float32
    bf16 = jnp.bfloat16

    # ---- trunk: Linear -> LayerNorm (biased var, eps=1e-5, as nn.LayerNorm) -> Tanh ----
    # obs and all weights arrive as bf16; the MXU accumulates in f32.
    h = jnp.dot(obs_ref[...], wt_ref[...], preferred_element_type=f32) + bt_ref[...]
    # Padded lanes of h are exactly 0 (zero-padded wt columns / bt), so plain sums over
    # the padded axis divided by the TRUE feature count give exact LayerNorm statistics.
    mean = jnp.sum(h, axis=-1, keepdims=True) * inv_feature
    var = jnp.sum(h * h, axis=-1, keepdims=True) * inv_feature - mean * mean
    h = (h - mean) * jax.lax.rsqrt(var + 1e-5)
    # gamma/beta are 0 in padded lanes -> padded lanes of the trunk output are tanh(0)=0.
    h = jnp.tanh(h * g_ref[...] + beta_ref[...])

    # ---- policy MLP: Linear -> ReLU -> Linear -> ReLU -> Linear (bf16 ops, f32 acc) ----
    x = jnp.dot(h.astype(bf16), w1_ref[...], preferred_element_type=f32) + b1_ref[...]
    x = jnp.maximum(x, 0.0)
    x = jnp.dot(x.astype(bf16), w2_ref[...], preferred_element_type=f32) + b2_ref[...]
    x = jnp.maximum(x, 0.0)
    x = jnp.dot(x.astype(bf16), w3_ref[...], preferred_element_type=f32) + b3_ref[...]

    # ---- final squash: mu = tanh(policy(h)) ----
    mu_ref[...] = jnp.tanh(x).astype(mu_ref.dtype)


def init_params(key, repr_dim, action_dim, feature_dim, hidden_dim):
    """Logical (unpadded) f32 parameters; Linear weights stored pre-transposed (in, out)."""
    ks = jax.random.split(key, 4)

    def lin(k, fan_in, fan_out):
        w = jax.random.normal(k, (fan_in, fan_out), jnp.float32) / jnp.sqrt(fan_in)
        b = jnp.zeros((1, fan_out), jnp.float32)
        return w, b

    wt, bt = lin(ks[0], repr_dim, feature_dim)
    w1, b1 = lin(ks[1], feature_dim, hidden_dim)
    w2, b2 = lin(ks[2], hidden_dim, hidden_dim)
    w3, b3 = lin(ks[3], hidden_dim, action_dim)
    return dict(repr_dim=repr_dim, action_dim=action_dim,
                feature_dim=feature_dim, hidden_dim=hidden_dim,
                wt=wt, bt=bt,
                gamma=jnp.ones((1, feature_dim), jnp.float32),
                beta=jnp.zeros((1, feature_dim), jnp.float32),
                w1=w1, b1=b1, w2=w2, b2=b2, w3=w3, b3=b3)


def pack_params(p):
    """Pad every dim to a multiple of 128 and cast matmul weights to bf16 (once)."""
    repr_dim, feature_dim = p["wt"].shape
    hidden_dim = p["w1"].shape[1]
    action_dim = p["action_dim"]
    repr_pad = _round_up(repr_dim, LANE)
    feat_pad = _round_up(feature_dim, LANE)
    hid_pad = _round_up(hidden_dim, LANE)
    a_pad = _round_up(action_dim, LANE)

    def pad2(w, r, c, dtype):
        return jnp.zeros((r, c), dtype).at[:w.shape[0], :w.shape[1]].set(w.astype(dtype))

    return dict(
        repr_dim=repr_dim, feature_dim=feature_dim,
        hidden_dim=hidden_dim, action_dim=action_dim,
        wt=pad2(p["wt"], repr_pad, feat_pad, jnp.bfloat16),
        bt=pad2(p["bt"], 1, feat_pad, jnp.float32),
        # gamma/beta MUST be zero in padded lanes (annihilates padded LayerNorm lanes).
        gamma=pad2(p["gamma"], 1, feat_pad, jnp.float32),
        beta=pad2(p["beta"], 1, feat_pad, jnp.float32),
        w1=pad2(p["w1"], feat_pad, hid_pad, jnp.bfloat16),
        b1=pad2(p["b1"], 1, hid_pad, jnp.float32),
        w2=pad2(p["w2"], hid_pad, hid_pad, jnp.bfloat16),
        b2=pad2(p["b2"], 1, hid_pad, jnp.float32),
        w3=pad2(p["w3"], hid_pad, a_pad, jnp.bfloat16),
        b3=pad2(p["b3"], 1, a_pad, jnp.float32),
    )


def actor_forward(obs, packed, std, *, tile_b=256):
    """Returns (mu, std) of the TruncatedNormal policy distribution."""
    B, repr_dim = obs.shape
    assert repr_dim == packed["repr_dim"]
    repr_pad, feat_pad = packed["wt"].shape
    hid_pad = packed["w1"].shape[1]
    a_pad = packed["w3"].shape[1]
    action_dim = packed["action_dim"]

    # Batch tile: multiple of 16 (bf16 sublane packing). For small B the tile covers the
    # whole padded batch -> single grid step (no pipeline bubble, minimal padding).
    tile_b = _round_up(max(16, min(tile_b, _round_up(B, 16))), 16)
    b_pad = pl.cdiv(B, tile_b) * tile_b
    grid = (b_pad // tile_b,)

    # Pad obs rows to the grid and columns to the padded repr dim; feed as bf16.
    obs_p = jnp.zeros((b_pad, repr_pad), jnp.bfloat16).at[:B, :repr_dim].set(
        obs.astype(jnp.bfloat16))

    weight_args = (packed["wt"], packed["bt"], packed["gamma"], packed["beta"],
                   packed["w1"], packed["b1"], packed["w2"], packed["b2"],
                   packed["w3"], packed["b3"])

    def make_weight_specs(single_buffer):
        # Weights/biases stay VMEM-resident across all batch tiles (constant block index);
        # single-buffer them so invariant blocks don't pay 2x VMEM (v7x: 64 MiB VMEM).
        specs = []
        for w in weight_args:
            if single_buffer:
                specs.append(pl.BlockSpec(w.shape, lambda i: (0, 0),
                                          pipeline_mode=pl.Buffered(1)))
            else:
                specs.append(pl.BlockSpec(w.shape, lambda i: (0, 0)))
        return specs

    flops = int(2 * b_pad * (repr_pad * feat_pad + feat_pad * hid_pad
                             + hid_pad * hid_pad + hid_pad * a_pad))
    transcendentals = int(b_pad * (feat_pad + a_pad))
    bytes_accessed = int(obs_p.size * 2
                         + sum(int(w.size) * w.dtype.itemsize for w in weight_args)
                         + b_pad * a_pad * 4)

    kernel = functools.partial(actor_kernel, inv_feature=1.0 / packed["feature_dim"])

    def run(weight_specs):
        return pl.pallas_call(
            kernel,
            out_shape=jax.ShapeDtypeStruct((b_pad, a_pad), jnp.float32),
            grid=grid,
            in_specs=[pl.BlockSpec((tile_b, repr_pad), lambda i: (i, 0))] + weight_specs,
            out_specs=pl.BlockSpec((tile_b, a_pad), lambda i: (i, 0)),
            compiler_params=pltpu.CompilerParams(
                dimension_semantics=("parallel",),      # megacore: batch tiles across TCs
                vmem_limit_bytes=48 << 20),
            cost_estimate=pl.CostEstimate(flops=flops,
                                          transcendentals=transcendentals,
                                          bytes_accessed=bytes_accessed),
        )(obs_p, *weight_args)

    try:
        mu_pad = run(make_weight_specs(single_buffer=True))
    except Exception:
        # Fallback if this JAX build rejects single-buffered invariant blocks.
        mu_pad = run(make_weight_specs(single_buffer=False))

    mu = mu_pad[:B, :action_dim]
    std_arr = jnp.ones_like(mu) * std
    # TODO(synk): utils.TruncatedNormal(mu, std) is a sampling/clamping distribution
    # object with no Pallas equivalent; the kernel returns its (mu, std) parameters.
    return mu, std_arr


def reference_forward(obs, p, std):
    h = obs @ p["wt"] + p["bt"]
    mean = h.mean(-1, keepdims=True)
    var = ((h - mean) ** 2).mean(-1, keepdims=True)
    h = jnp.tanh((h - mean) / jnp.sqrt(var + 1e-5) * p["gamma"] + p["beta"])
    x = jnp.maximum(h @ p["w1"] + p["b1"], 0.0)
    x = jnp.maximum(x @ p["w2"] + p["b2"], 0.0)
    mu = jnp.tanh(x @ p["w3"] + p["b3"])
    return mu, jnp.ones_like(mu) * std


if __name__ == "__main__":
    # Small, deliberately non-aligned shapes (exercise batch / lane / contraction padding).
    B, repr_dim, action_dim, feature_dim, hidden_dim = 40, 39, 7, 50, 64
    std = 0.1

    key = jax.random.PRNGKey(0)
    k_obs, k_par = jax.random.split(key)
    obs = jax.random.normal(k_obs, (B, repr_dim), jnp.float32)
    params = init_params(k_par, repr_dim, action_dim, feature_dim, hidden_dim)
    packed = pack_params(params)

    mu, std_out = actor_forward(obs, packed, std)        # single-step grid for this B
    mu = jax.block_until_ready(mu)
    std_out = jax.block_until_ready(std_out)

    mu_ref, std_ref = reference_forward(obs, params, std)
    assert mu.shape == (B, action_dim)
    assert std_out.shape == (B, action_dim)
    # bf16 MXU operands vs. the f32 reference: tolerance loosened deliberately.
    assert jnp.allclose(mu, mu_ref, atol=3e-2, rtol=3e-2), \
        float(jnp.max(jnp.abs(mu - mu_ref)))
    assert jnp.allclose(std_out, std_ref)
    print("KERNEL_OK")
</pallas_src>

<mosaic_0001>
module attributes {stable_mosaic.version = 11 : i64} {
  func.func @actor_kernel(%arg0: i32, %arg1: memref<48x128xbf16, #tpu.memory_space<vmem>>, %arg2: memref<128x128xbf16, #tpu.memory_space<vmem>>, %arg3: memref<1x128xf32, #tpu.memory_space<vmem>>, %arg4: memref<1x128xf32, #tpu.memory_space<vmem>>, %arg5: memref<1x128xf32, #tpu.memory_space<vmem>>, %arg6: memref<128x128xbf16, #tpu.memory_space<vmem>>, %arg7: memref<1x128xf32, #tpu.memory_space<vmem>>, %arg8: memref<128x128xbf16, #tpu.memory_space<vmem>>, %arg9: memref<1x128xf32, #tpu.memory_space<vmem>>, %arg10: memref<128x128xbf16, #tpu.memory_space<vmem>>, %arg11: memref<1x128xf32, #tpu.memory_space<vmem>>, %arg12: memref<48x128xf32, #tpu.memory_space<vmem>>) attributes {dimension_semantics = [#tpu.dimension_semantics<parallel>], iteration_bounds = array<i64: 1>, scalar_prefetch = 0 : i64, scratch_operands = 0 : i64, tpu.core_type = #tpu.core_type<tc>, window_params = [{transform_indices = @transform_0, window_bounds = array<i64: 48, 128>}, {pipeline_mode = #tpu.pipeline_mode<synchronous>, transform_indices = @transform_1, window_bounds = array<i64: 128, 128>}, {pipeline_mode = #tpu.pipeline_mode<synchronous>, transform_indices = @transform_2, window_bounds = array<i64: 1, 128>}, {pipeline_mode = #tpu.pipeline_mode<synchronous>, transform_indices = @transform_3, window_bounds = array<i64: 1, 128>}, {pipeline_mode = #tpu.pipeline_mode<synchronous>, transform_indices = @transform_4, window_bounds = array<i64: 1, 128>}, {pipeline_mode = #tpu.pipeline_mode<synchronous>, transform_indices = @transform_5, window_bounds = array<i64: 128, 128>}, {pipeline_mode = #tpu.pipeline_mode<synchronous>, transform_indices = @transform_6, window_bounds = array<i64: 1, 128>}, {pipeline_mode = #tpu.pipeline_mode<synchronous>, transform_indices = @transform_7, window_bounds = array<i64: 128, 128>}, {pipeline_mode = #tpu.pipeline_mode<synchronous>, transform_indices = @transform_8, window_bounds = array<i64: 1, 128>}, {pipeline_mode = #tpu.pipeline_mode<synchronous>, transform_indices = @transform_9, window_bounds = array<i64: 128, 128>}, {pipeline_mode = #tpu.pipeline_mode<synchronous>, transform_indices = @transform_10, window_bounds = array<i64: 1, 128>}, {transform_indices = @transform_11, window_bounds = array<i64: 48, 128>}]} {
    %c0 = arith.constant 0 : index
    %c0_0 = arith.constant 0 : index
    %0 = vector.load %arg1[%c0, %c0_0] : memref<48x128xbf16, #tpu.memory_space<vmem>>, vector<48x128xbf16>
    %c0_1 = arith.constant 0 : index
    %c0_2 = arith.constant 0 : index
    %1 = vector.load %arg2[%c0_1, %c0_2] : memref<128x128xbf16, #tpu.memory_space<vmem>>, vector<128x128xbf16>
    %cst = arith.constant dense<0.000000e+00> : vector<48x128xf32>
    %2 = tpu.matmul %0, %1, %cst {dimension_numbers = #tpu.dot_dimension_numbers<[1], [0], [0], [1], [0, 0, 1, 1], [], []>} : vector<48x128xbf16>, vector<128x128xbf16>, vector<48x128xf32> -> vector<48x128xf32>
    %c0_3 = arith.constant 0 : index
    %c0_4 = arith.constant 0 : index
    %3 = vector.load %arg3[%c0_3, %c0_4] : memref<1x128xf32, #tpu.memory_space<vmem>>, vector<1x128xf32>
    %4 = vector.broadcast %3 : vector<1x128xf32> to vector<48x128xf32>
    %5 = arith.addf %2, %4 : vector<48x128xf32>
    %cst_5 = arith.constant dense<0.000000e+00> : vector<48xf32>
    %6 = vector.multi_reduction <add>, %5, %cst_5 [1] : vector<48x128xf32> to vector<48xf32>
    %7 = vector.shape_cast %6 : vector<48xf32> to vector<48x1xf32>
    %cst_6 = arith.constant 2.000000e-02 : f32
    %8 = vector.broadcast %cst_6 : f32 to vector<48x1xf32>
    %9 = arith.mulf %7, %8 : vector<48x1xf32>
    %10 = arith.mulf %5, %5 : vector<48x128xf32>
    %cst_7 = arith.constant dense<0.000000e+00> : vector<48xf32>
    %11 = vector.multi_reduction <add>, %10, %cst_7 [1] : vector<48x128xf32> to vector<48xf32>
    %12 = vector.shape_cast %11 : vector<48xf32> to vector<48x1xf32>
    %cst_8 = arith.constant 2.000000e-02 : f32
    %13 = vector.broadcast %cst_8 : f32 to vector<48x1xf32>
    %14 = arith.mulf %12, %13 : vector<48x1xf32>
    %15 = arith.mulf %9, %9 : vector<48x1xf32>
    %16 = arith.subf %14, %15 : vector<48x1xf32>
    %17 = vector.broadcast %9 : vector<48x1xf32> to vector<48x128xf32>
    %18 = arith.subf %5, %17 : vector<48x128xf32>
    %cst_9 = arith.constant 9.99999974E-6 : f32
    %19 = vector.broadcast %cst_9 : f32 to vector<48x1xf32>
    %20 = arith.addf %16, %19 : vector<48x1xf32>
    %21 = math.rsqrt %20 : vector<48x1xf32>
    %22 = vector.broadcast %21 : vector<48x1xf32> to vector<48x128xf32>
    %23 = arith.mulf %18, %22 : vector<48x128xf32>
    %c0_10 = arith.constant 0 : index
    %c0_11 = arith.constant 0 : index
    %24 = vector.load %arg4[%c0_10, %c0_11] : memref<1x128xf32, #tpu.memory_space<vmem>>, vector<1x128xf32>
    %25 = vector.broadcast %24 : vector<1x128xf32> to vector<48x128xf32>
    %26 = arith.mulf %23, %25 : vector<48x128xf32>
    %c0_12 = arith.constant 0 : index
    %c0_13 = arith.constant 0 : index
    %27 = vector.load %arg5[%c0_12, %c0_13] : memref<1x128xf32, #tpu.memory_space<vmem>>, vector<1x128xf32>
    %28 = vector.broadcast %27 : vector<1x128xf32> to vector<48x128xf32>
    %29 = arith.addf %26, %28 : vector<48x128xf32>
    %30 = math.tanh %29 : vector<48x128xf32>
    %31 = arith.truncf %30 : vector<48x128xf32> to vector<48x128xbf16>
    %c0_14 = arith.constant 0 : index
    %c0_15 = arith.constant 0 : index
    %32 = vector.load %arg6[%c0_14, %c0_15] : memref<128x128xbf16, #tpu.memory_space<vmem>>, vector<128x128xbf16>
    %cst_16 = arith.constant dense<0.000000e+00> : vector<48x128xf32>
    %33 = tpu.matmul %31, %32, %cst_16 {dimension_numbers = #tpu.dot_dimension_numbers<[1], [0], [0], [1], [0, 0, 1, 1], [], []>} : vector<48x128xbf16>, vector<128x128xbf16>, vector<48x128xf32> -> vector<48x128xf32>
    %c0_17 = arith.constant 0 : index
    %c0_18 = arith.constant 0 : index
    %34 = vector.load %arg7[%c0_17, %c0_18] : memref<1x128xf32, #tpu.memory_space<vmem>>, vector<1x128xf32>
    %35 = vector.broadcast %34 : vector<1x128xf32> to vector<48x128xf32>
    %36 = arith.addf %33, %35 : vector<48x128xf32>
    %cst_19 = arith.constant 0.000000e+00 : f32
    %37 = vector.broadcast %cst_19 : f32 to vector<48x128xf32>
    %38 = arith.maximumf %36, %37 : vector<48x128xf32>
    %39 = arith.truncf %38 : vector<48x128xf32> to vector<48x128xbf16>
    %c0_20 = arith.constant 0 : index
    %c0_21 = arith.constant 0 : index
    %40 = vector.load %arg8[%c0_20, %c0_21] : memref<128x128xbf16, #tpu.memory_space<vmem>>, vector<128x128xbf16>
    %cst_22 = arith.constant dense<0.000000e+00> : vector<48x128xf32>
    %41 = tpu.matmul %39, %40, %cst_22 {dimension_numbers = #tpu.dot_dimension_numbers<[1], [0], [0], [1], [0, 0, 1, 1], [], []>} : vector<48x128xbf16>, vector<128x128xbf16>, vector<48x128xf32> -> vector<48x128xf32>
    %c0_23 = arith.constant 0 : index
    %c0_24 = arith.constant 0 : index
    %42 = vector.load %arg9[%c0_23, %c0_24] : memref<1x128xf32, #tpu.memory_space<vmem>>, vector<1x128xf32>
    %43 = vector.broadcast %42 : vector<1x128xf32> to vector<48x128xf32>
    %44 = arith.addf %41, %43 : vector<48x128xf32>
    %cst_25 = arith.constant 0.000000e+00 : f32
    %45 = vector.broadcast %cst_25 : f32 to vector<48x128xf32>
    %46 = arith.maximumf %44, %45 : vector<48x128xf32>
    %47 = arith.truncf %46 : vector<48x128xf32> to vector<48x128xbf16>
    %c0_26 = arith.constant 0 : index
    %c0_27 = arith.constant 0 : index
    %48 = vector.load %arg10[%c0_26, %c0_27] : memref<128x128xbf16, #tpu.memory_space<vmem>>, vector<128x128xbf16>
    %cst_28 = arith.constant dense<0.000000e+00> : vector<48x128xf32>
    %49 = tpu.matmul %47, %48, %cst_28 {dimension_numbers = #tpu.dot_dimension_numbers<[1], [0], [0], [1], [0, 0, 1, 1], [], []>} : vector<48x128xbf16>, vector<128x128xbf16>, vector<48x128xf32> -> vector<48x128xf32>
    %c0_29 = arith.constant 0 : index
    %c0_30 = arith.constant 0 : index
    %50 = vector.load %arg11[%c0_29, %c0_30] : memref<1x128xf32, #tpu.memory_space<vmem>>, vector<1x128xf32>
    %51 = vector.broadcast %50 : vector<1x128xf32> to vector<48x128xf32>
    %52 = arith.addf %49, %51 : vector<48x128xf32>
    %53 = math.tanh %52 : vector<48x128xf32>
    %c0_31 = arith.constant 0 : index
    %c0_32 = arith.constant 0 : index
    %54 = vector.load %arg12[%c0_31, %c0_32] : memref<48x128xf32, #tpu.memory_space<vmem>>, vector<48x128xf32>
    tpu.vector_store %arg12[%c0_31, %c0_32], %53 {strides = array<i32>} : memref<48x128xf32, #tpu.memory_space<vmem>>, vector<48x128xf32>,
    return
  }
  func.func @transform_0(%arg0: i32) -> (i32, i32) {
    %c0_i32 = arith.constant 0 : i32
    %c0_i32_0 = arith.constant 0 : i32
    return %arg0, %c0_i32 : i32, i32
  }
  func.func @transform_1(%arg0: i32) -> (i32, i32) {
    %c0_i32 = arith.constant 0 : i32
    %c0_i32_0 = arith.constant 0 : i32
    %c0_i32_1 = arith.constant 0 : i32
    return %c0_i32, %c0_i32_0 : i32, i32
  }
  func.func @transform_2(%arg0: i32) -> (i32, i32) {
    %c0_i32 = arith.constant 0 : i32
    %c0_i32_0 = arith.constant 0 : i32
    %c0_i32_1 = arith.constant 0 : i32
    return %c0_i32, %c0_i32_0 : i32, i32
  }
  func.func @transform_3(%arg0: i32) -> (i32, i32) {
    %c0_i32 = arith.constant 0 : i32
    %c0_i32_0 = arith.constant 0 : i32
    %c0_i32_1 = arith.constant 0 : i32
    return %c0_i32, %c0_i32_0 : i32, i32
  }
  func.func @transform_4(%arg0: i32) -> (i32, i32) {
    %c0_i32 = arith.constant 0 : i32
    %c0_i32_0 = arith.constant 0 : i32
    %c0_i32_1 = arith.constant 0 : i32
    return %c0_i32, %c0_i32_0 : i32, i32
  }
  func.func @transform_5(%arg0: i32) -> (i32, i32) {
    %c0_i32 = arith.constant 0 : i32
    %c0_i32_0 = arith.constant 0 : i32
    %c0_i32_1 = arith.constant 0 : i32
    return %c0_i32, %c0_i32_0 : i32, i32
  }
  func.func @transform_6(%arg0: i32) -> (i32, i32) {
    %c0_i32 = arith.constant 0 : i32
    %c0_i32_0 = arith.constant 0 : i32
    %c0_i32_1 = arith.constant 0 : i32
    return %c0_i32, %c0_i32_0 : i32, i32
  }
  func.func @transform_7(%arg0: i32) -> (i32, i32) {
    %c0_i32 = arith.constant 0 : i32
    %c0_i32_0 = arith.constant 0 : i32
    %c0_i32_1 = arith.constant 0 : i32
    return %c0_i32, %c0_i32_0 : i32, i32
  }
  func.func @transform_8(%arg0: i32) -> (i32, i32) {
    %c0_i32 = arith.constant 0 : i32
    %c0_i32_0 = arith.constant 0 : i32
    %c0_i32_1 = arith.constant 0 : i32
    return %c0_i32, %c0_i32_0 : i32, i32
  }
  func.func @transform_9(%arg0: i32) -> (i32, i32) {
    %c0_i32 = arith.constant 0 : i32
    %c0_i32_0 = arith.constant 0 : i32
    %c0_i32_1 = arith.constant 0 : i32
    return %c0_i32, %c0_i32_0 : i32, i32
  }
  func.func @transform_10(%arg0: i32) -> (i32, i32) {
    %c0_i32 = arith.constant 0 : i32
    %c0_i32_0 = arith.constant 0 : i32
    %c0_i32_1 = arith.constant 0 : i32
    return %c0_i32, %c0_i32_0 : i32, i32
  }
  func.func @transform_11(%arg0: i32) -> (i32, i32) {
    %c0_i32 = arith.constant 0 : i32
    %c0_i32_0 = arith.constant 0 : i32
    return %arg0, %c0_i32 : i32, i32
  }
}

module attributes {stable_mosaic.version = 11 : i64} {
  func.func @actor_kernel(%arg0: i32, %arg1: memref<48x128xbf16, #tpu.memory_space<vmem>>, %arg2: memref<128x128xbf16, #tpu.memory_space<vmem>>, %arg3: memref<1x128xf32, #tpu.memory_space<vmem>>, %arg4: memref<1x128xf32, #tpu.memory_space<vmem>>, %arg5: memref<1x128xf32, #tpu.memory_space<vmem>>, %arg6: memref<128x128xbf16, #tpu.memory_space<vmem>>, %arg7: memref<1x128xf32, #tpu.memory_space<vmem>>, %arg8: memref<128x128xbf16, #tpu.memory_space<vmem>>, %arg9: memref<1x128xf32, #tpu.memory_space<vmem>>, %arg10: memref<128x128xbf16, #tpu.memory_space<vmem>>, %arg11: memref<1x128xf32, #tpu.memory_space<vmem>>, %arg12: memref<48x128xf32, #tpu.memory_space<vmem>>) attributes {dimension_semantics = [#tpu.dimension_semantics<parallel>], iteration_bounds = array<i64: 1>, scalar_prefetch = 0 : i64, scratch_operands = 0 : i64, tpu.core_type = #tpu.core_type<tc>, window_params = [{transform_indices = @transform_0, window_bounds = array<i64: 48, 128>}, {pipeline_mode = #tpu.pipeline_mode<synchronous>, transform_indices = @transform_1, window_bounds = array<i64: 128, 128>}, {pipeline_mode = #tpu.pipeline_mode<synchronous>, transform_indices = @transform_2, window_bounds = array<i64: 1, 128>}, {pipeline_mode = #tpu.pipeline_mode<synchronous>, transform_indices = @transform_3, window_bounds = array<i64: 1, 128>}, {pipeline_mode = #tpu.pipeline_mode<synchronous>, transform_indices = @transform_4, window_bounds = array<i64: 1, 128>}, {pipeline_mode = #tpu.pipeline_mode<synchronous>, transform_indices = @transform_5, window_bounds = array<i64: 128, 128>}, {pipeline_mode = #tpu.pipeline_mode<synchronous>, transform_indices = @transform_6, window_bounds = array<i64: 1, 128>}, {pipeline_mode = #tpu.pipeline_mode<synchronous>, transform_indices = @transform_7, window_bounds = array<i64: 128, 128>}, {pipeline_mode = #tpu.pipeline_mode<synchronous>, transform_indices = @transform_8, window_bounds = array<i64: 1, 128>}, {pipeline_mode = #tpu.pipeline_mode<synchronous>, transform_indices = @transform_9, window_bounds = array<i64: 128, 128>}, {pipeline_mode = #tpu.pipeline_mode<synchronous>, transform_indices = @transform_10, window_bounds = array<i64: 1, 128>}, {transform_indices = @transform_11, window_bounds = array<i64: 48, 128>}]} {
    %c0 = arith.constant 0 : index
    %c0_0 = arith.constant 0 : index
    %0 = vector.load %arg1[%c0, %c0_0] : memref<48x128xbf16, #tpu.memory_space<vmem>>, vector<48x128xbf16>
    %c0_1 = arith.constant 0 : index
    %c0_2 = arith.constant 0 : index
    %1 = vector.load %arg2[%c0_1, %c0_2] : memref<128x128xbf16, #tpu.memory_space<vmem>>, vector<128x128xbf16>
    %cst = arith.constant dense<0.000000e+00> : vector<48x128xf32>
    %2 = tpu.matmul %0, %1, %cst {dimension_numbers = #tpu.dot_dimension_numbers<[1], [0], [0], [1], [0, 0, 1, 1], [], []>} : vector<48x128xbf16>, vector<128x128xbf16>, vector<48x128xf32> -> vector<48x128xf32>
    %c0_3 = arith.constant 0 : index
    %c0_4 = arith.constant 0 : index
    %3 = vector.load %arg3[%c0_3, %c0_4] : memref<1x128xf32, #tpu.memory_space<vmem>>, vector<1x128xf32>
    %4 = vector.broadcast %3 : vector<1x128xf32> to vector<48x128xf32>
    %5 = arith.addf %2, %4 : vector<48x128xf32>
    %cst_5 = arith.constant dense<0.000000e+00> : vector<48xf32>
    %6 = vector.multi_reduction <add>, %5, %cst_5 [1] : vector<48x128xf32> to vector<48xf32>
    %7 = vector.shape_cast %6 : vector<48xf32> to vector<48x1xf32>
    %cst_6 = arith.constant 2.000000e-02 : f32
    %8 = vector.broadcast %cst_6 : f32 to vector<48x1xf32>
    %9 = arith.mulf %7, %8 : vector<48x1xf32>
    %10 = arith.mulf %5, %5 : vector<48x128xf32>
    %cst_7 = arith.constant dense<0.000000e+00> : vector<48xf32>
    %11 = vector.multi_reduction <add>, %10, %cst_7 [1] : vector<48x128xf32> to vector<48xf32>
    %12 = vector.shape_cast %11 : vector<48xf32> to vector<48x1xf32>
    %cst_8 = arith.constant 2.000000e-02 : f32
    %13 = vector.broadcast %cst_8 : f32 to vector<48x1xf32>
    %14 = arith.mulf %12, %13 : vector<48x1xf32>
    %15 = arith.mulf %9, %9 : vector<48x1xf32>
    %16 = arith.subf %14, %15 : vector<48x1xf32>
    %17 = vector.broadcast %9 : vector<48x1xf32> to vector<48x128xf32>
    %18 = arith.subf %5, %17 : vector<48x128xf32>
    %cst_9 = arith.constant 9.99999974E-6 : f32
    %19 = vector.broadcast %cst_9 : f32 to vector<48x1xf32>
    %20 = arith.addf %16, %19 : vector<48x1xf32>
    %21 = math.rsqrt %20 : vector<48x1xf32>
    %22 = vector.broadcast %21 : vector<48x1xf32> to vector<48x128xf32>
    %23 = arith.mulf %18, %22 : vector<48x128xf32>
    %c0_10 = arith.constant 0 : index
    %c0_11 = arith.constant 0 : index
    %24 = vector.load %arg4[%c0_10, %c0_11] : memref<1x128xf32, #tpu.memory_space<vmem>>, vector<1x128xf32>
    %25 = vector.broadcast %24 : vector<1x128xf32> to vector<48x128xf32>
    %26 = arith.mulf %23, %25 : vector<48x128xf32>
    %c0_12 = arith.constant 0 : index
    %c0_13 = arith.constant 0 : index
    %27 = vector.load %arg5[%c0_12, %c0_13] : memref<1x128xf32, #tpu.memory_space<vmem>>, vector<1x128xf32>
    %28 = vector.broadcast %27 : vector<1x128xf32> to vector<48x128xf32>
    %29 = arith.addf %26, %28 : vector<48x128xf32>
    %30 = math.tanh %29 : vector<48x128xf32>
    %31 = arith.truncf %30 : vector<48x128xf32> to vector<48x128xbf16>
    %c0_14 = arith.constant 0 : index
    %c0_15 = arith.constant 0 : index
    %32 = vector.load %arg6[%c0_14, %c0_15] : memref<128x128xbf16, #tpu.memory_space<vmem>>, vector<128x128xbf16>
    %cst_16 = arith.constant dense<0.000000e+00> : vector<48x128xf32>
    %33 = tpu.matmul %31, %32, %cst_16 {dimension_numbers = #tpu.dot_dimension_numbers<[1], [0], [0], [1], [0, 0, 1, 1], [], []>} : vector<48x128xbf16>, vector<128x128xbf16>, vector<48x128xf32> -> vector<48x128xf32>
    %c0_17 = arith.constant 0 : index
    %c0_18 = arith.constant 0 : index
    %34 = vector.load %arg7[%c0_17, %c0_18] : memref<1x128xf32, #tpu.memory_space<vmem>>, vector<1x128xf32>
    %35 = vector.broadcast %34 : vector<1x128xf32> to vector<48x128xf32>
    %36 = arith.addf %33, %35 : vector<48x128xf32>
    %cst_19 = arith.constant 0.000000e+00 : f32
    %37 = vector.broadcast %cst_19 : f32 to vector<48x128xf32>
    %38 = arith.maximumf %36, %37 : vector<48x128xf32>
    %39 = arith.truncf %38 : vector<48x128xf32> to vector<48x128xbf16>
    %c0_20 = arith.constant 0 : index
    %c0_21 = arith.constant 0 : index
    %40 = vector.load %arg8[%c0_20, %c0_21] : memref<128x128xbf16, #tpu.memory_space<vmem>>, vector<128x128xbf16>
    %cst_22 = arith.constant dense<0.000000e+00> : vector<48x128xf32>
    %41 = tpu.matmul %39, %40, %cst_22 {dimension_numbers = #tpu.dot_dimension_numbers<[1], [0], [0], [1], [0, 0, 1, 1], [], []>} : vector<48x128xbf16>, vector<128x128xbf16>, vector<48x128xf32> -> vector<48x128xf32>
    %c0_23 = arith.constant 0 : index
    %c0_24 = arith.constant 0 : index
    %42 = vector.load %arg9[%c0_23, %c0_24] : memref<1x128xf32, #tpu.memory_space<vmem>>, vector<1x128xf32>
    %43 = vector.broadcast %42 : vector<1x128xf32> to vector<48x128xf32>
    %44 = arith.addf %41, %43 : vector<48x128xf32>
    %cst_25 = arith.constant 0.000000e+00 : f32
    %45 = vector.broadcast %cst_25 : f32 to vector<48x128xf32>
    %46 = arith.maximumf %44, %45 : vector<48x128xf32>
    %47 = arith.truncf %46 : vector<48x128xf32> to vector<48x128xbf16>
    %c0_26 = arith.constant 0 : index
    %c0_27 = arith.constant 0 : index
    %48 = vector.load %arg10[%c0_26, %c0_27] : memref<128x128xbf16, #tpu.memory_space<vmem>>, vector<128x128xbf16>
    %cst_28 = arith.constant dense<0.000000e+00> : vector<48x128xf32>
    %49 = tpu.matmul %47, %48, %cst_28 {dimension_numbers = #tpu.dot_dimension_numbers<[1], [0], [0], [1], [0, 0, 1, 1], [], []>} : vector<48x128xbf16>, vector<128x128xbf16>, vector<48x128xf32> -> vector<48x128xf32>
    %c0_29 = arith.constant 0 : index
    %c0_30 = arith.constant 0 : index
    %50 = vector.load %arg11[%c0_29, %c0_30] : memref<1x128xf32, #tpu.memory_space<vmem>>, vector<1x128xf32>
    %51 = vector.broadcast %50 : vector<1x128xf32> to vector<48x128xf32>
    %52 = arith.addf %49, %51 : vector<48x128xf32>
    %53 = math.tanh %52 : vector<48x128xf32>
    %c0_31 = arith.constant 0 : index
    %c0_32 = arith.constant 0 : index
    %54 = vector.load %arg12[%c0_31, %c0_32] : memref<48x128xf32, #tpu.memory_space<vmem>>, vector<48x128xf32>
    tpu.vector_store %arg12[%c0_31, %c0_32], %53 {strides = array<i32>} : memref<48x128xf32, #tpu.memory_space<vmem>>, vector<48x128xf32>,
    return
  }
  func.func @transform_0(%arg0: i32) -> (i32, i32) {
    %c0_i32 = arith.constant 0 : i32
    %c0_i32_0 = arith.constant 0 : i32
    return %arg0, %c0_i32 : i32, i32
  }
  func.func @transform_1(%arg0: i32) -> (i32, i32) {
    %c0_i32 = arith.constant 0 : i32
    %c0_i32_0 = arith.constant 0 : i32
    %c0_i32_1 = arith.constant 0 : i32
    return %c0_i32, %c0_i32_0 : i32, i32
  }
  func.func @transform_2(%arg0: i32) -> (i32, i32) {
    %c0_i32 = arith.constant 0 : i32
    %c0_i32_0 = arith.constant 0 : i32
    %c0_i32_1 = arith.constant 0 : i32
    return %c0_i32, %c0_i32_0 : i32, i32
  }
  func.func @transform_3(%arg0: i32) -> (i32, i32) {
    %c0_i32 = arith.constant 0 : i32
    %c0_i32_0 = arith.constant 0 : i32
    %c0_i32_1 = arith.constant 0 : i32
    return %c0_i32, %c0_i32_0 : i32, i32
  }
  func.func @transform_4(%arg0: i32) -> (i32, i32) {
    %c0_i32 = arith.constant 0 : i32
    %c0_i32_0 = arith.constant 0 : i32
    %c0_i32_1 = arith.constant 0 : i32
    return %c0_i32, %c0_i32_0 : i32, i32
  }
  func.func @transform_5(%arg0: i32) -> (i32, i32) {
    %c0_i32 = arith.constant 0 : i32
    %c0_i32_0 = arith.constant 0 : i32
    %c0_i32_1 = arith.constant 0 : i32
    return %c0_i32, %c0_i32_0 : i32, i32
  }
  func.func @transform_6(%arg0: i32) -> (i32, i32) {
    %c0_i32 = arith.constant 0 : i32
    %c0_i32_0 = arith.constant 0 : i32
    %c0_i32_1 = arith.constant 0 : i32
    return %c0_i32, %c0_i32_0 : i32, i32
  }
  func.func @transform_7(%arg0: i32) -> (i32, i32) {
    %c0_i32 = arith.constant 0 : i32
    %c0_i32_0 = arith.constant 0 : i32
    %c0_i32_1 = arith.constant 0 : i32
    return %c0_i32, %c0_i32_0 : i32, i32
  }
  func.func @transform_8(%arg0: i32) -> (i32, i32) {
    %c0_i32 = arith.constant 0 : i32
    %c0_i32_0 = arith.constant 0 : i32
    %c0_i32_1 = arith.constant 0 : i32
    return %c0_i32, %c0_i32_0 : i32, i32
  }
  func.func @transform_9(%arg0: i32) -> (i32, i32) {
    %c0_i32 = arith.constant 0 : i32
    %c0_i32_0 = arith.constant 0 : i32
    %c0_i32_1 = arith.constant 0 : i32
    return %c0_i32, %c0_i32_0 : i32, i32
  }
  func.func @transform_10(%arg0: i32) -> (i32, i32) {
    %c0_i32 = arith.constant 0 : i32
    %c0_i32_0 = arith.constant 0 : i32
    %c0_i32_1 = arith.constant 0 : i32
    return %c0_i32, %c0_i32_0 : i32, i32
  }
  func.func @transform_11(%arg0: i32) -> (i32, i32) {
    %c0_i32 = arith.constant 0 : i32
    %c0_i32_0 = arith.constant 0 : i32
    return %arg0, %c0_i32 : i32, i32
  }
}

</mosaic_0001>

<llo_original>
// kernel: tpu_custom_call.1
$region0: #{tpu_custom_call.1}
  #allocation0 [shape = 'u32[]', space=smem, size = 0x4, offset = 0x4, fixed_abs, tag = 'smem constant byte address 0x4 - core index']
  #allocation1 [shape = 'u32[144,128]{1,0:T(1,128)}', space=vmem, size = 0x12000, scoped, tag = 'internal scratch']
  %s0 = inlined_call_operand.hbm [shape: bf16[48,128], index: 0, kind: input, shape index: {}]
  %s1 = inlined_call_operand.hbm [shape: bf16[128,128], index: 1, kind: input, shape index: {}]
  %s2 = inlined_call_operand.vmem [shape: f32[1,128], index: 2, kind: input, shape index: {}]
  %s3 = inlined_call_operand.vmem [shape: f32[1,128], index: 3, kind: input, shape index: {}]
  %s4 = inlined_call_operand.vmem [shape: f32[1,128], index: 4, kind: input, shape index: {}]
  %s5 = inlined_call_operand.hbm [shape: bf16[128,128], index: 5, kind: input, shape index: {}]
  %s6 = inlined_call_operand.vmem [shape: f32[1,128], index: 6, kind: input, shape index: {}]
  %s7 = inlined_call_operand.hbm [shape: bf16[128,128], index: 7, kind: input, shape index: {}]
  %s8 = inlined_call_operand.vmem [shape: f32[1,128], index: 8, kind: input, shape index: {}]
  %s9 = inlined_call_operand.hbm [shape: bf16[128,128], index: 9, kind: input, shape index: {}]
  %s10 = inlined_call_operand.vmem [shape: f32[1,128], index: 10, kind: input, shape index: {}]
  %s11 = inlined_call_operand.hbm [shape: f32[48,128], index: 11, kind: output, shape index: {}]
  %s12 = sld [smem:[#allocation0]]
  $region74: #{tpu_custom_call.1} parent=0
    _
  %s14 = ssub.s32 1, %s12
  %s15 = scalar_select 0, %s14, %s12
  $region1: #{tpu_custom_call.1} parent=0
    #allocation2 [shape = 'u8[12288]{0}', space=vmem, size = 0x3000, scoped, tag = 'input window, operand 0, single buffered']
    #allocation3 [shape = 's32[1]{0}', space=sflag, size = 0x4, scoped, tag = 'scoped memory for tpu_custom_call.1']
    #allocation4 [shape = 's32[1]{0}', space=sflag, size = 0x4, scoped, tag = 'scoped memory for tpu_custom_call.1']
    #allocation5 [shape = 'u8[32768]{0}', space=vmem, size = 0x8000, scoped, tag = 'input window, operand 1, single buffered']
    #allocation6 [shape = 's32[1]{0}', space=sflag, size = 0x4, scoped, tag = 'scoped memory for tpu_custom_call.1']
    #allocation7 [shape = 'u8[32768]{0}', space=vmem, size = 0x8000, scoped, tag = 'input window, operand 5, single buffered']
    #allocation8 [shape = 'u8[32768]{0}', space=vmem, size = 0x8000, scoped, tag = 'input window, operand 7, single buffered']
    #allocation9 [shape = 's32[1]{0}', space=sflag, size = 0x4, scoped, tag = 'scoped memory for tpu_custom_call.1']
    #allocation10 [shape = 'u8[32768]{0}', space=vmem, size = 0x8000, scoped, tag = 'input window, operand 9, single buffered']
    #allocation11 [shape = 'u8[24576]{0}', space=vmem, size = 0x6000, scoped, tag = 'output window, operand 0, single buffered']
    %16 = vsyncpa [#allocation3], 0
    %17 = vsyncpa [#allocation6], 0
    %18 = vsyncpa [#allocation9], 0
    %19 = vsyncpa [#allocation4], 0
    // Predicated region
    $region2: #{tpu_custom_call.1} parent=1 // pred_check
      _
    $region3: #{tpu_custom_call.1} parent=1 // pred_check_branch
      %21 = sbr.rel (0) target = $region5
    $region4: #{tpu_custom_call.1} parent=1 // pred_region
      %s23 = ssub.s32 384, 384
      %24 = vsyncadd [#allocation3], %s23
      %s25 = sshll.u32 [#allocation2], 4
      %s26 = int_to_ptr.vmem [resolvable:$true] %s25
      %31 = dma.hbm_to_vmem [thread:$0]  %s0, 384, %s26, [#allocation3], 64, 64, 4
    $region5: #{tpu_custom_call.1} parent=1 // pred_fallthru
      _
    // Predicated region
    $region6: #{tpu_custom_call.1} parent=1 // pred_check
      _
    $region7: #{tpu_custom_call.1} parent=1 // pred_check_branch
      %33 = sbr.rel (0) target = $region9
    $region8: #{tpu_custom_call.1} parent=1 // pred_region
      %s35 = ssub.s32 1024, 1024
      %36 = vsyncadd [#allocation6], %s35
      %s37 = sshll.u32 [#allocation5], 4
      %s38 = int_to_ptr.vmem [resolvable:$true] %s37
      %43 = dma.hbm_to_vmem [thread:$0]  %s1, 1024, %s38, [#allocation6], 64, 64, 4
    $region9: #{tpu_custom_call.1} parent=1 // pred_fallthru
      _
    // Predicated region
    $region10: #{tpu_custom_call.1} parent=1 // pred_check
      _
    $region11: #{tpu_custom_call.1} parent=1 // pred_check_branch
      %45 = sbr.rel (0) target = $region13
    $region12: #{tpu_custom_call.1} parent=1 // pred_region
      _
    $region13: #{tpu_custom_call.1} parent=1 // pred_fallthru
      _
    // Predicated region
    $region14: #{tpu_custom_call.1} parent=1 // pred_check
      _
    $region15: #{tpu_custom_call.1} parent=1 // pred_check_branch
      %47 = sbr.rel (0) target = $region17
    $region16: #{tpu_custom_call.1} parent=1 // pred_region
      _
    $region17: #{tpu_custom_call.1} parent=1 // pred_fallthru
      _
    // Predicated region
    $region18: #{tpu_custom_call.1} parent=1 // pred_check
      _
    $region19: #{tpu_custom_call.1} parent=1 // pred_check_branch
      %49 = sbr.rel (0) target = $region21
    $region20: #{tpu_custom_call.1} parent=1 // pred_region
      _
    $region21: #{tpu_custom_call.1} parent=1 // pred_fallthru
      _
    // Predicated region
    $region22: #{tpu_custom_call.1} parent=1 // pred_check
      _
    $region23: #{tpu_custom_call.1} parent=1 // pred_check_branch
      %51 = sbr.rel (0) target = $region25
    $region24: #{tpu_custom_call.1} parent=1 // pred_region
      %s53 = ssub.s32 1024, 1024
      %54 = vsyncadd [#allocation6], %s53
      %s55 = sshll.u32 [#allocation7], 4
      %s56 = int_to_ptr.vmem [resolvable:$true] %s55
      %61 = dma.hbm_to_vmem [thread:$0]  %s5, 1024, %s56, [#allocation6], 64, 64, 4
    $region25: #{tpu_custom_call.1} parent=1 // pred_fallthru
      _
    // Predicated region
    $region26: #{tpu_custom_call.1} parent=1 // pred_check
      _
    $region27: #{tpu_custom_call.1} parent=1 // pred_check_branch
      %63 = sbr.rel (0) target = $region29
    $region28: #{tpu_custom_call.1} parent=1 // pred_region
      _
    $region29: #{tpu_custom_call.1} parent=1 // pred_fallthru
      _
    // Predicated region
    $region30: #{tpu_custom_call.1} parent=1 // pred_check
      _
    $region31: #{tpu_custom_call.1} parent=1 // pred_check_branch
      %65 = sbr.rel (0) target = $region33
    $region32: #{tpu_custom_call.1} parent=1 // pred_region
      %s67 = ssub.s32 1024, 1024
      %68 = vsyncadd [#allocation9], %s67
      %s69 = sshll.u32 [#allocation8], 4
      %s70 = int_to_ptr.vmem [resolvable:$true] %s69
      %75 = dma.hbm_to_vmem [thread:$0]  %s7, 1024, %s70, [#allocation9], 64, 64, 4
    $region33: #{tpu_custom_call.1} parent=1 // pred_fallthru
      _
    // Predicated region
    $region34: #{tpu_custom_call.1} parent=1 // pred_check
      _
    $region35: #{tpu_custom_call.1} parent=1 // pred_check_branch
      %77 = sbr.rel (0) target = $region37
    $region36: #{tpu_custom_call.1} parent=1 // pred_region
      _
    $region37: #{tpu_custom_call.1} parent=1 // pred_fallthru
      _
    // Predicated region
    $region38: #{tpu_custom_call.1} parent=1 // pred_check
      _
    $region39: #{tpu_custom_call.1} parent=1 // pred_check_branch
      %79 = sbr.rel (0) target = $region41
    $region40: #{tpu_custom_call.1} parent=1 // pred_region
      %s81 = ssub.s32 1024, 1024
      %82 = vsyncadd [#allocation9], %s81
      %s83 = sshll.u32 [#allocation10], 4
      %s84 = int_to_ptr.vmem [resolvable:$true] %s83
      %89 = dma.hbm_to_vmem [thread:$0]  %s9, 1024, %s84, [#allocation9], 64, 64, 4
    $region41: #{tpu_custom_call.1} parent=1 // pred_fallthru
      _
    // Predicated region
    $region42: #{tpu_custom_call.1} parent=1 // pred_check
      _
    $region43: #{tpu_custom_call.1} parent=1 // pred_check_branch
      %91 = sbr.rel (0) target = $region45
    $region44: #{tpu_custom_call.1} parent=1 // pred_region
      _
    $region45: #{tpu_custom_call.1} parent=1 // pred_fallthru
      _
    // Predicated region
    $region46: #{tpu_custom_call.1} parent=1 // pred_check
      _
    $region47: #{tpu_custom_call.1} parent=1 // pred_check_branch
      %93 = sbr.rel (0) target = $region49
    $region48: #{tpu_custom_call.1} parent=1 // pred_region
      %94 = dma.done [#allocation3], 384
    $region49: #{tpu_custom_call.1} parent=1 // pred_fallthru
      _
    // Predicated region
    $region50: #{tpu_custom_call.1} parent=1 // pred_check
      _
    $region51: #{tpu_custom_call.1} parent=1 // pred_check_branch
      %96 = sbr.rel (0) target = $region53
    $region52: #{tpu_custom_call.1} parent=1 // pred_region
      %97 = dma.done [#allocation6], 1024
    $region53: #{tpu_custom_call.1} parent=1 // pred_fallthru
      _
    // Predicated region
    $region54: #{tpu_custom_call.1} parent=1 // pred_check
      _
    $region55: #{tpu_custom_call.1} parent=1 // pred_check_branch
      %99 = sbr.rel (0) target = $region57
    $region56: #{tpu_custom_call.1} parent=1 // pred_region
      %100 = dma.done [#allocation6], 1024
    $region57: #{tpu_custom_call.1} parent=1 // pred_fallthru
      _
    // Predicated region
    $region58: #{tpu_custom_call.1} parent=1 // pred_check
      _
    $region59: #{tpu_custom_call.1} parent=1 // pred_check_branch
      %102 = sbr.rel (0) target = $region61
    $region60: #{tpu_custom_call.1} parent=1 // pred_region
      %103 = dma.done [#allocation9], 1024
    $region61: #{tpu_custom_call.1} parent=1 // pred_fallthru
      _
    // Predicated region
    $region62: #{tpu_custom_call.1} parent=1 // pred_check
      _
    $region63: #{tpu_custom_call.1} parent=1 // pred_check_branch
      %105 = sbr.rel (0) target = $region65
    $region64: #{tpu_custom_call.1} parent=1 // pred_region
      %106 = dma.done [#allocation9], 1024
    $region65: #{tpu_custom_call.1} parent=1 // pred_fallthru
      _
    %v108 = vld [vmem:[#allocation2] sm:$0xf]
    %v109 = vld [vmem:[#allocation2 + $0x4] sm:$0xf]
    %v110 = vld [vmem:[#allocation2 + $0x8] sm:$0xf]
    %v111 = vld [vmem:[#allocation2 + $0xc] sm:$0xf]
    %v112 = vld [vmem:[#allocation2 + $0x10] sm:$0xf]
    %v113 = vld [vmem:[#allocation2 + $0x14] sm:$0xf]
    %v114 = vld [vmem:[#allocation5] sm:$0xf]
    %v115 = vld [vmem:[#allocation5 + $0x4] sm:$0xf]
    %v116 = vld [vmem:[#allocation5 + $0x8] sm:$0xf]
    %v117 = vld [vmem:[#allocation5 + $0xc] sm:$0xf]
    %v118 = vld [vmem:[#allocation5 + $0x10] sm:$0xf]
    %v119 = vld [vmem:[#allocation5 + $0x14] sm:$0xf]
    %v120 = vld [vmem:[#allocation5 + $0x18] sm:$0xf]
    %v121 = vld [vmem:[#allocation5 + $0x1c] sm:$0xf]
    %v122 = vld [vmem:[#allocation5 + $0x20] sm:$0xf]
    %v123 = vld [vmem:[#allocation5 + $0x24] sm:$0xf]
    %v124 = vld [vmem:[#allocation5 + $0x28] sm:$0xf]
    %v125 = vld [vmem:[#allocation5 + $0x2c] sm:$0xf]
    %v126 = vld [vmem:[#allocation5 + $0x30] sm:$0xf]
    %v127 = vld [vmem:[#allocation5 + $0x34] sm:$0xf]
    %v128 = vld [vmem:[#allocation5 + $0x38] sm:$0xf]
    %v129 = vld [vmem:[#allocation5 + $0x3c] sm:$0xf]
    %v130 = vld [vmem:[%s2] sm:$0x1]
    %v132 = vlaneseq
    %v133 = vshrl.u32 %v132, 7
    %v134 = vsub.s32 0, %v133
    %v135 = vrot.slane %v130, %v134
    %v143 = vunpack.c.l.b16 %v108
    %v144 = vunpack.c.l.b16 %v109
    %v145 = vunpack.c.l.b16 %v110
    %v146 = vunpack.c.l.b16 %v111
    %v147 = vunpack.c.l.b16 %v112
    %v148 = vunpack.c.l.b16 %v113
    %v149 = vpack.c.b16 %v144, %v143
    %v150 = vpack.c.b16 %v146, %v145
    %v151 = vpack.c.b16 %v148, %v147
    %v171 = vunpack.c.l.b16 %v114
    %v172 = vunpack.c.l.b16 %v115
    %v173 = vunpack.c.l.b16 %v116
    %v174 = vunpack.c.l.b16 %v117
    %v175 = vunpack.c.l.b16 %v118
    %v176 = vunpack.c.l.b16 %v119
    %v177 = vunpack.c.l.b16 %v120
    %v178 = vunpack.c.l.b16 %v121
    %v179 = vunpack.c.l.b16 %v122
    %v180 = vunpack.c.l.b16 %v123
    %v181 = vunpack.c.l.b16 %v124
    %v182 = vunpack.c.l.b16 %v125
    %v183 = vunpack.c.l.b16 %v126
    %v184 = vunpack.c.l.b16 %v127
    %v185 = vunpack.c.l.b16 %v128
    %v186 = vunpack.c.l.b16 %v129
    %v187 = vpack.c.b16 %v172, %v171
    %v188 = vpack.c.b16 %v174, %v173
    %v189 = vpack.c.b16 %v176, %v175
    %v190 = vpack.c.b16 %v178, %v177
    %v191 = vpack.c.b16 %v180, %v179
    %v192 = vpack.c.b16 %v182, %v181
    %v193 = vpack.c.b16 %v184, %v183
    %v194 = vpack.c.b16 %v186, %v185
    %203 = vmatprep.subr.bf16.mxu0 0
    %204 = vmatpush1.bf16.msra.mxu0 %v194
    %205 = vmatprep.subr.bf16.mxu0 0
    %206 = vmatpush1.bf16.msra.mxu0 %v193
    %207 = vmatprep.subr.bf16.mxu0 0
    %208 = vmatpush1.bf16.msra.mxu0 %v192
    %209 = vmatprep.subr.bf16.mxu0 0
    %210 = vmatpush1.bf16.msra.mxu0 %v191
    %211 = vmatprep.subr.bf16.mxu0 0
    %212 = vmatpush1.bf16.msra.mxu0 %v190
    %213 = vmatprep.subr.bf16.mxu0 0
    %214 = vmatpush1.bf16.msra.mxu0 %v189
    %215 = vmatprep.subr.bf16.mxu0 0
    %216 = vmatpush1.bf16.msra.mxu0 %v188
    %217 = vmatprep.subr.bf16.mxu0 0
    %218 = vmatpush1.bf16.msra.mxu0 %v187
    %219 = vmatprep.subr.bf16.mxu0 0
    %220 = vmatpush2.bf16.msra.mxu0 0
    %221 = vmatprep.subr.bf16.mxu0 0
    %222 = vmatpush2.bf16.msra.mxu0 0
    %223 = vmatprep.subr.bf16.mxu0 0
    %224 = vmatpush2.bf16.msra.mxu0 0
    %225 = vmatprep.subr.bf16.mxu0 0
    %226 = vmatpush2.bf16.msra.mxu0 0
    %227 = vmatprep.subr.bf16.mxu0 0
    %228 = vmatpush2.bf16.msra.mxu0 0
    %229 = vmatprep.subr.bf16.mxu0 0
    %230 = vmatpush2.bf16.msra.mxu0 0
    %231 = vmatprep.subr.bf16.mxu0 0
    %232 = vmatpush2.bf16.msra.mxu0 0
    %233 = vmatprep.subr.bf16.mxu0 0
    %234 = vmatpush2.bf16.msra.mxu0 0
    %235 = vmatprep.mubr.bf16.mxu0 0
    %236 = vmatmul.mubr.bf16.gmra.mxu0 %v149
    %v237 = vpop.f32.mrf.mxu0
    %v238 = vadd.f32 %v135, %v237
    %v239 = vpop.f32.mrf.mxu0
    %v240 = vpop.f32.mrf.mxu0
    %v241 = vadd.f32 %v135, %v240
    %v242 = vpop.f32.mrf.mxu0
    %243 = vmatprep.mubr.bf16.mxu0 0
    %244 = vmatmul.mubr.bf16.gmra.mxu0 %v150
    %v245 = vpop.f32.mrf.mxu0
    %v246 = vadd.f32 %v135, %v245
    %v247 = vpop.f32.mrf.mxu0
    %v248 = vpop.f32.mrf.mxu0
    %v249 = vadd.f32 %v135, %v248
    %v250 = vpop.f32.mrf.mxu0
    %251 = vmatprep.mubr.bf16.mxu0 0
    %252 = vmatmul.mubr.bf16.gmra.mxu0 %v151
    %v253 = vpop.f32.mrf.mxu0
    %v254 = vadd.f32 %v135, %v253
    %v255 = vpop.f32.mrf.mxu0
    %v256 = vpop.f32.mrf.mxu0
    %v257 = vadd.f32 %v135, %v256
    %v258 = vpop.f32.mrf.mxu0
    %259 = vdwg.mxu0
    %260 = vadd.xlane.f32.xlu0 %v238
    %v261 = vpop.xlane.xlu0 %260
    %262 = vadd.xlane.f32.xlu0 %v241
    %v263 = vpop.xlane.xlu0 %262
    %264 = vadd.xlane.f32.xlu0 %v246
    %v265 = vpop.xlane.xlu0 %264
    %266 = vadd.xlane.f32.xlu0 %v249
    %v267 = vpop.xlane.xlu0 %266
    %268 = vadd.xlane.f32.xlu0 %v254
    %v269 = vpop.xlane.xlu0 %268
    %270 = vadd.xlane.f32.xlu0 %v257
    %v271 = vpop.xlane.xlu0 %270
    %v272 = vmul.f32 %v261, 0.02
    %v273 = vmul.f32 %v263, 0.02
    %v274 = vmul.f32 %v265, 0.02
    %v275 = vmul.f32 %v267, 0.02
    %v276 = vmul.f32 %v269, 0.02
    %v277 = vmul.f32 %v271, 0.02
    %v278 = vmul.f32 %v238, %v238
    %v279 = vmul.f32 %v241, %v241
    %v280 = vmul.f32 %v246, %v246
    %v281 = vmul.f32 %v249, %v249
    %v282 = vmul.f32 %v254, %v254
    %v283 = vmul.f32 %v257, %v257
    %284 = vadd.xlane.f32.xlu0 %v278
    %v285 = vpop.xlane.xlu0 %284
    %286 = vadd.xlane.f32.xlu0 %v279
    %v287 = vpop.xlane.xlu0 %286
    %288 = vadd.xlane.f32.xlu0 %v280
    %v289 = vpop.xlane.xlu0 %288
    %290 = vadd.xlane.f32.xlu0 %v281
    %v291 = vpop.xlane.xlu0 %290
    %292 = vadd.xlane.f32.xlu0 %v282
    %v293 = vpop.xlane.xlu0 %292
    %294 = vadd.xlane.f32.xlu0 %v283
    %v295 = vpop.xlane.xlu0 %294
    %v296 = vmul.f32 %v285, 0.02
    %v297 = vmul.f32 %v287, 0.02
    %v298 = vmul.f32 %v289, 0.02
    %v299 = vmul.f32 %v291, 0.02
    %v300 = vmul.f32 %v293, 0.02
    %v301 = vmul.f32 %v295, 0.02
    %v302 = vmul.f32 %v272, %v272
    %v303 = vmul.f32 %v273, %v273
    %v304 = vmul.f32 %v274, %v274
    %v305 = vmul.f32 %v275, %v275
    %v306 = vmul.f32 %v276, %v276
    %v307 = vmul.f32 %v277, %v277
    %v308 = vsub.f32 %v296, %v302
    %v309 = vsub.f32 %v297, %v303
    %v310 = vsub.f32 %v298, %v304
    %v311 = vsub.f32 %v299, %v305
    %v312 = vsub.f32 %v300, %v306
    %v313 = vsub.f32 %v301, %v307
    %v314 = vsub.f32 %v238, %v272
    %v315 = vsub.f32 %v241, %v273
    %v316 = vsub.f32 %v246, %v274
    %v317 = vsub.f32 %v249, %v275
    %v318 = vsub.f32 %v254, %v276
    %v319 = vsub.f32 %v257, %v277
    %v320 = vadd.f32 %v308, 1e-05
    %v321 = vadd.f32 %v309, 1e-05
    %v322 = vadd.f32 %v310, 1e-05
    %v323 = vadd.f32 %v311, 1e-05
    %v324 = vadd.f32 %v312, 1e-05
    %v325 = vadd.f32 %v313, 1e-05
    %v326 = vrsqrt.pop %v320
    %v327 = vrsqrt.pop %v321
    %v328 = vrsqrt.pop %v322
    %v329 = vrsqrt.pop %v323
    %v330 = vrsqrt.pop %v324
    %v331 = vrsqrt.pop %v325
    %v332 = vmul.f32 %v314, %v326
    %v333 = vmul.f32 %v315, %v327
    %v334 = vmul.f32 %v316, %v328
    %v335 = vmul.f32 %v317, %v329
    %v336 = vmul.f32 %v318, %v330
    %v337 = vmul.f32 %v319, %v331
    %v338 = vld [vmem:[%s3] sm:$0x1]
    %v340 = vlaneseq
    %v341 = vshrl.u32 %v340, 7
    %v342 = vsub.s32 0, %v341
    %v343 = vrot.slane %v338, %v342
    %v345 = vmul.f32 %v332, %v343
    %v346 = vmul.f32 %v333, %v343
    %v347 = vmul.f32 %v334, %v343
    %v348 = vmul.f32 %v335, %v343
    %v349 = vmul.f32 %v336, %v343
    %v350 = vmul.f32 %v337, %v343
    %v351 = vld [vmem:[%s4] sm:$0x1]
    %v353 = vlaneseq
    %v354 = vshrl.u32 %v353, 7
    %v355 = vsub.s32 0, %v354
    %v356 = vrot.slane %v351, %v355
    %v358 = vadd.f32 %v345, %v356
    %v359 = vadd.f32 %v346, %v356
    %v360 = vadd.f32 %v347, %v356
    %v361 = vadd.f32 %v348, %v356
    %v362 = vadd.f32 %v349, %v356
    %v363 = vadd.f32 %v350, %v356
    %v364 = vtanh.pop %v358
    %v365 = vtanh.pop %v359
    %v366 = vtanh.pop %v360
    %v367 = vtanh.pop %v361
    %v368 = vtanh.pop %v362
    %v369 = vtanh.pop %v363
    %v370 = vpack.c.bf16 %v365, %v364
    %v371 = vpack.c.bf16 %v367, %v366
    %v372 = vpack.c.bf16 %v369, %v368
    %v373 = vld [vmem:[#allocation7] sm:$0xf]
    %v374 = vld [vmem:[#allocation7 + $0x4] sm:$0xf]
    %v375 = vld [vmem:[#allocation7 + $0x8] sm:$0xf]
    %v376 = vld [vmem:[#allocation7 + $0xc] sm:$0xf]
    %v377 = vld [vmem:[#allocation7 + $0x10] sm:$0xf]
    %v378 = vld [vmem:[#allocation7 + $0x14] sm:$0xf]
    %v379 = vld [vmem:[#allocation7 + $0x18] sm:$0xf]
    %v380 = vld [vmem:[#allocation7 + $0x1c] sm:$0xf]
    %v381 = vld [vmem:[#allocation7 + $0x20] sm:$0xf]
    %v382 = vld [vmem:[#allocation7 + $0x24] sm:$0xf]
    %v383 = vld [vmem:[#allocation7 + $0x28] sm:$0xf]
    %v384 = vld [vmem:[#allocation7 + $0x2c] sm:$0xf]
    %v385 = vld [vmem:[#allocation7 + $0x30] sm:$0xf]
    %v386 = vld [vmem:[#allocation7 + $0x34] sm:$0xf]
    %v387 = vld [vmem:[#allocation7 + $0x38] sm:$0xf]
    %v388 = vld [vmem:[#allocation7 + $0x3c] sm:$0xf]
    %v389 = vld [vmem:[%s6] sm:$0x1]
    %v391 = vlaneseq
    %v392 = vshrl.u32 %v391, 7
    %v393 = vsub.s32 0, %v392
    %v394 = vrot.slane %v389, %v393
    %v412 = vunpack.c.l.b16 %v373
    %v413 = vunpack.c.l.b16 %v374
    %v414 = vunpack.c.l.b16 %v375
    %v415 = vunpack.c.l.b16 %v376
    %v416 = vunpack.c.l.b16 %v377
    %v417 = vunpack.c.l.b16 %v378
    %v418 = vunpack.c.l.b16 %v379
    %v419 = vunpack.c.l.b16 %v380
    %v420 = vunpack.c.l.b16 %v381
    %v421 = vunpack.c.l.b16 %v382
    %v422 = vunpack.c.l.b16 %v383
    %v423 = vunpack.c.l.b16 %v384
    %v424 = vunpack.c.l.b16 %v385
    %v425 = vunpack.c.l.b16 %v386
    %v426 = vunpack.c.l.b16 %v387
    %v427 = vunpack.c.l.b16 %v388
    %v428 = vpack.c.b16 %v413, %v412
    %v429 = vpack.c.b16 %v415, %v414
    %v430 = vpack.c.b16 %v417, %v416
    %v431 = vpack.c.b16 %v419, %v418
    %v432 = vpack.c.b16 %v421, %v420
    %v433 = vpack.c.b16 %v423, %v422
    %v434 = vpack.c.b16 %v425, %v424
    %v435 = vpack.c.b16 %v427, %v426
    %444 = vmatprep.subr.bf16.mxu0 0
    %445 = vmatpush1.bf16.msra.mxu0 %v435
    %446 = vmatprep.subr.bf16.mxu0 0
    %447 = vmatpush1.bf16.msra.mxu0 %v434
    %448 = vmatprep.subr.bf16.mxu0 0
    %449 = vmatpush1.bf16.msra.mxu0 %v433
    %450 = vmatprep.subr.bf16.mxu0 0
    %451 = vmatpush1.bf16.msra.mxu0 %v432
    %452 = vmatprep.subr.bf16.mxu0 0
    %453 = vmatpush1.bf16.msra.mxu0 %v431
    %454 = vmatprep.subr.bf16.mxu0 0
    %455 = vmatpush1.bf16.msra.mxu0 %v430
    %456 = vmatprep.subr.bf16.mxu0 0
    %457 = vmatpush1.bf16.msra.mxu0 %v429
    %458 = vmatprep.subr.bf16.mxu0 0
    %459 = vmatpush1.bf16.msra.mxu0 %v428
    %460 = vmatprep.subr.bf16.mxu0 0
    %461 = vmatpush2.bf16.msra.mxu0 0
    %462 = vmatprep.subr.bf16.mxu0 0
    %463 = vmatpush2.bf16.msra.mxu0 0
    %464 = vmatprep.subr.bf16.mxu0 0
    %465 = vmatpush2.bf16.msra.mxu0 0
    %466 = vmatprep.subr.bf16.mxu0 0
    %467 = vmatpush2.bf16.msra.mxu0 0
    %468 = vmatprep.subr.bf16.mxu0 0
    %469 = vmatpush2.bf16.msra.mxu0 0
    %470 = vmatprep.subr.bf16.mxu0 0
    %471 = vmatpush2.bf16.msra.mxu0 0
    %472 = vmatprep.subr.bf16.mxu0 0
    %473 = vmatpush2.bf16.msra.mxu0 0
    %474 = vmatprep.subr.bf16.mxu0 0
    %475 = vmatpush2.bf16.msra.mxu0 0
    %476 = vmatprep.mubr.bf16.mxu0 0
    %477 = vmatmul.mubr.bf16.gmra.mxu0 %v370
    %v478 = vpop.f32.mrf.mxu0
    %v479 = vadd.f32 %v394, %v478
    %v480 = vpop.f32.mrf.mxu0
    %v481 = vpop.f32.mrf.mxu0
    %v482 = vadd.f32 %v394, %v481
    %v483 = vpop.f32.mrf.mxu0
    %484 = vmatprep.mubr.bf16.mxu0 0
    %485 = vmatmul.mubr.bf16.gmra.mxu0 %v371
    %v486 = vpop.f32.mrf.mxu0
    %v487 = vadd.f32 %v394, %v486
    %v488 = vpop.f32.mrf.mxu0
    %v489 = vpop.f32.mrf.mxu0
    %v490 = vadd.f32 %v394, %v489
    %v491 = vpop.f32.mrf.mxu0
    %492 = vmatprep.mubr.bf16.mxu0 0
    %493 = vmatmul.mubr.bf16.gmra.mxu0 %v372
    %v494 = vpop.f32.mrf.mxu0
    %v495 = vadd.f32 %v394, %v494
    %v496 = vpop.f32.mrf.mxu0
    %v497 = vpop.f32.mrf.mxu0
    %v498 = vadd.f32 %v394, %v497
    %v499 = vpop.f32.mrf.mxu0
    %500 = vdwg.mxu0
    %v501 = vmax.f32 %v479, 0.0
    %v502 = vmax.f32 %v482, 0.0
    %v503 = vmax.f32 %v487, 0.0
    %v504 = vmax.f32 %v490, 0.0
    %v505 = vmax.f32 %v495, 0.0
    %v506 = vmax.f32 %v498, 0.0
    %v507 = vpack.c.bf16 %v502, %v501
    %v508 = vpack.c.bf16 %v504, %v503
    %v509 = vpack.c.bf16 %v506, %v505
    %v510 = vld [vmem:[#allocation8] sm:$0xf]
    %v511 = vld [vmem:[#allocation8 + $0x4] sm:$0xf]
    %v512 = vld [vmem:[#allocation8 + $0x8] sm:$0xf]
    %v513 = vld [vmem:[#allocation8 + $0xc] sm:$0xf]
    %v514 = vld [vmem:[#allocation8 + $0x10] sm:$0xf]
    %v515 = vld [vmem:[#allocation8 + $0x14] sm:$0xf]
    %v516 = vld [vmem:[#allocation8 + $0x18] sm:$0xf]
    %v517 = vld [vmem:[#allocation8 + $0x1c] sm:$0xf]
    %v518 = vld [vmem:[#allocation8 + $0x20] sm:$0xf]
    %v519 = vld [vmem:[#allocation8 + $0x24] sm:$0xf]
    %v520 = vld [vmem:[#allocation8 + $0x28] sm:$0xf]
    %v521 = vld [vmem:[#allocation8 + $0x2c] sm:$0xf]
    %v522 = vld [vmem:[#allocation8 + $0x30] sm:$0xf]
    %v523 = vld [vmem:[#allocation8 + $0x34] sm:$0xf]
    %v524 = vld [vmem:[#allocation8 + $0x38] sm:$0xf]
    %v525 = vld [vmem:[#allocation8 + $0x3c] sm:$0xf]
    %v526 = vld [vmem:[%s8] sm:$0x1]
    %v528 = vlaneseq
    %v529 = vshrl.u32 %v528, 7
    %v530 = vsub.s32 0, %v529
    %v531 = vrot.slane %v526, %v530
    %v549 = vunpack.c.l.b16 %v510
    %v550 = vunpack.c.l.b16 %v511
    %v551 = vunpack.c.l.b16 %v512
    %v552 = vunpack.c.l.b16 %v513
    %v553 = vunpack.c.l.b16 %v514
    %v554 = vunpack.c.l.b16 %v515
    %v555 = vunpack.c.l.b16 %v516
    %v556 = vunpack.c.l.b16 %v517
    %v557 = vunpack.c.l.b16 %v518
    %v558 = vunpack.c.l.b16 %v519
    %v559 = vunpack.c.l.b16 %v520
    %v560 = vunpack.c.l.b16 %v521
    %v561 = vunpack.c.l.b16 %v522
    %v562 = vunpack.c.l.b16 %v523
    %v563 = vunpack.c.l.b16 %v524
    %v564 = vunpack.c.l.b16 %v525
    %v565 = vpack.c.b16 %v550, %v549
    %v566 = vpack.c.b16 %v552, %v551
    %v567 = vpack.c.b16 %v554, %v553
    %v568 = vpack.c.b16 %v556, %v555
    %v569 = vpack.c.b16 %v558, %v557
    %v570 = vpack.c.b16 %v560, %v559
    %v571 = vpack.c.b16 %v562, %v561
    %v572 = vpack.c.b16 %v564, %v563
    %581 = vmatprep.subr.bf16.mxu0 0
    %582 = vmatpush1.bf16.msra.mxu0 %v572
    %583 = vmatprep.subr.bf16.mxu0 0
    %584 = vmatpush1.bf16.msra.mxu0 %v571
    %585 = vmatprep.subr.bf16.mxu0 0
    %586 = vmatpush1.bf16.msra.mxu0 %v570
    %587 = vmatprep.subr.bf16.mxu0 0
    %588 = vmatpush1.bf16.msra.mxu0 %v569
    %589 = vmatprep.subr.bf16.mxu0 0
    %590 = vmatpush1.bf16.msra.mxu0 %v568
    %591 = vmatprep.subr.bf16.mxu0 0
    %592 = vmatpush1.bf16.msra.mxu0 %v567
    %593 = vmatprep.subr.bf16.mxu0 0
    %594 = vmatpush1.bf16.msra.mxu0 %v566
    %595 = vmatprep.subr.bf16.mxu0 0
    %596 = vmatpush1.bf16.msra.mxu0 %v565
    %597 = vmatprep.subr.bf16.mxu0 0
    %598 = vmatpush2.bf16.msra.mxu0 0
    %599 = vmatprep.subr.bf16.mxu0 0
    %600 = vmatpush2.bf16.msra.mxu0 0
    %601 = vmatprep.subr.bf16.mxu0 0
    %602 = vmatpush2.bf16.msra.mxu0 0
    %603 = vmatprep.subr.bf16.mxu0 0
    %604 = vmatpush2.bf16.msra.mxu0 0
    %605 = vmatprep.subr.bf16.mxu0 0
    %606 = vmatpush2.bf16.msra.mxu0 0
    %607 = vmatprep.subr.bf16.mxu0 0
    %608 = vmatpush2.bf16.msra.mxu0 0
    %609 = vmatprep.subr.bf16.mxu0 0
    %610 = vmatpush2.bf16.msra.mxu0 0
    %611 = vmatprep.subr.bf16.mxu0 0
    %612 = vmatpush2.bf16.msra.mxu0 0
    %613 = vmatprep.mubr.bf16.mxu0 0
    %614 = vmatmul.mubr.bf16.gmra.mxu0 %v507
    %v615 = vpop.f32.mrf.mxu0
    %v616 = vadd.f32 %v531, %v615
    %v617 = vpop.f32.mrf.mxu0
    %v618 = vpop.f32.mrf.mxu0
    %v619 = vadd.f32 %v531, %v618
    %v620 = vpop.f32.mrf.mxu0
    %621 = vmatprep.mubr.bf16.mxu0 0
    %622 = vmatmul.mubr.bf16.gmra.mxu0 %v508
    %v623 = vpop.f32.mrf.mxu0
    %v624 = vadd.f32 %v531, %v623
    %v625 = vpop.f32.mrf.mxu0
    %v626 = vpop.f32.mrf.mxu0
    %v627 = vadd.f32 %v531, %v626
    %v628 = vpop.f32.mrf.mxu0
    %629 = vmatprep.mubr.bf16.mxu0 0
    %630 = vmatmul.mubr.bf16.gmra.mxu0 %v509
    %v631 = vpop.f32.mrf.mxu0
    %v632 = vadd.f32 %v531, %v631
    %v633 = vpop.f32.mrf.mxu0
    %v634 = vpop.f32.mrf.mxu0
    %v635 = vadd.f32 %v531, %v634
    %v636 = vpop.f32.mrf.mxu0
    %637 = vdwg.mxu0
    %v638 = vmax.f32 %v616, 0.0
    %v639 = vmax.f32 %v619, 0.0
    %v640 = vmax.f32 %v624, 0.0
    %v641 = vmax.f32 %v627, 0.0
    %v642 = vmax.f32 %v632, 0.0
    %v643 = vmax.f32 %v635, 0.0
    %v644 = vpack.c.bf16 %v639, %v638
    %v645 = vpack.c.bf16 %v641, %v640
    %v646 = vpack.c.bf16 %v643, %v642
    %v647 = vld [vmem:[#allocation10] sm:$0xf]
    %v648 = vld [vmem:[#allocation10 + $0x4] sm:$0xf]
    %v649 = vld [vmem:[#allocation10 + $0x8] sm:$0xf]
    %v650 = vld [vmem:[#allocation10 + $0xc] sm:$0xf]
    %v651 = vld [vmem:[#allocation10 + $0x10] sm:$0xf]
    %v652 = vld [vmem:[#allocation10 + $0x14] sm:$0xf]
    %v653 = vld [vmem:[#allocation10 + $0x18] sm:$0xf]
    %v654 = vld [vmem:[#allocation10 + $0x1c] sm:$0xf]
    %v655 = vld [vmem:[#allocation10 + $0x20] sm:$0xf]
    %v656 = vld [vmem:[#allocation10 + $0x24] sm:$0xf]
    %v657 = vld [vmem:[#allocation10 + $0x28] sm:$0xf]
    %v658 = vld [vmem:[#allocation10 + $0x2c] sm:$0xf]
    %v659 = vld [vmem:[#allocation10 + $0x30] sm:$0xf]
    %v660 = vld [vmem:[#allocation10 + $0x34] sm:$0xf]
    %v661 = vld [vmem:[#allocation10 + $0x38] sm:$0xf]
    %v662 = vld [vmem:[#allocation10 + $0x3c] sm:$0xf]
    %v663 = vld [vmem:[%s10] sm:$0x1]
    %v665 = vlaneseq
    %v666 = vshrl.u32 %v665, 7
    %v667 = vsub.s32 0, %v666
    %v668 = vrot.slane %v663, %v667
    %v686 = vunpack.c.l.b16 %v647
    %v687 = vunpack.c.l.b16 %v648
    %v688 = vunpack.c.l.b16 %v649
    %v689 = vunpack.c.l.b16 %v650
    %v690 = vunpack.c.l.b16 %v651
    %v691 = vunpack.c.l.b16 %v652
    %v692 = vunpack.c.l.b16 %v653
    %v693 = vunpack.c.l.b16 %v654
    %v694 = vunpack.c.l.b16 %v655
    %v695 = vunpack.c.l.b16 %v656
    %v696 = vunpack.c.l.b16 %v657
    %v697 = vunpack.c.l.b16 %v658
    %v698 = vunpack.c.l.b16 %v659
    %v699 = vunpack.c.l.b16 %v660
    %v700 = vunpack.c.l.b16 %v661
    %v701 = vunpack.c.l.b16 %v662
    %v702 = vpack.c.b16 %v687, %v686
    %v703 = vpack.c.b16 %v689, %v688
    %v704 = vpack.c.b16 %v691, %v690
    %v705 = vpack.c.b16 %v693, %v692
    %v706 = vpack.c.b16 %v695, %v694
    %v707 = vpack.c.b16 %v697, %v696
    %v708 = vpack.c.b16 %v699, %v698
    %v709 = vpack.c.b16 %v701, %v700
    %718 = vmatprep.subr.bf16.mxu0 0
    %719 = vmatpush1.bf16.msra.mxu0 %v709
    %720 = vmatprep.subr.bf16.mxu0 0
    %721 = vmatpush1.bf16.msra.mxu0 %v708
    %722 = vmatprep.subr.bf16.mxu0 0
    %723 = vmatpush1.bf16.msra.mxu0 %v707
    %724 = vmatprep.subr.bf16.mxu0 0
    %725 = vmatpush1.bf16.msra.mxu0 %v706
    %726 = vmatprep.subr.bf16.mxu0 0
    %727 = vmatpush1.bf16.msra.mxu0 %v705
    %728 = vmatprep.subr.bf16.mxu0 0
    %729 = vmatpush1.bf16.msra.mxu0 %v704
    %730 = vmatprep.subr.bf16.mxu0 0
    %731 = vmatpush1.bf16.msra.mxu0 %v703
    %732 = vmatprep.subr.bf16.mxu0 0
    %733 = vmatpush1.bf16.msra.mxu0 %v702
    %734 = vmatprep.subr.bf16.mxu0 0
    %735 = vmatpush2.bf16.msra.mxu0 0
    %736 = vmatprep.subr.bf16.mxu0 0
    %737 = vmatpush2.bf16.msra.mxu0 0
    %738 = vmatprep.subr.bf16.mxu0 0
    %739 = vmatpush2.bf16.msra.mxu0 0
    %740 = vmatprep.subr.bf16.mxu0 0
    %741 = vmatpush2.bf16.msra.mxu0 0
    %742 = vmatprep.subr.bf16.mxu0 0
    %743 = vmatpush2.bf16.msra.mxu0 0
    %744 = vmatprep.subr.bf16.mxu0 0
    %745 = vmatpush2.bf16.msra.mxu0 0
    %746 = vmatprep.subr.bf16.mxu0 0
    %747 = vmatpush2.bf16.msra.mxu0 0
    %748 = vmatprep.subr.bf16.mxu0 0
    %749 = vmatpush2.bf16.msra.mxu0 0
    %750 = vmatprep.mubr.bf16.mxu0 0
    %751 = vmatmul.mubr.bf16.gmra.mxu0 %v644
    %v752 = vpop.f32.mrf.mxu0
    %v753 = vadd.f32 %v668, %v752
    %v754 = vpop.f32.mrf.mxu0
    %v755 = vpop.f32.mrf.mxu0
    %v756 = vadd.f32 %v668, %v755
    %v757 = vpop.f32.mrf.mxu0
    %758 = vmatprep.mubr.bf16.mxu0 0
    %759 = vmatmul.mubr.bf16.gmra.mxu0 %v645
    %v760 = vpop.f32.mrf.mxu0
    %v761 = vadd.f32 %v668, %v760
    %v762 = vpop.f32.mrf.mxu0
    %v763 = vpop.f32.mrf.mxu0
    %v764 = vadd.f32 %v668, %v763
    %v765 = vpop.f32.mrf.mxu0
    %766 = vmatprep.mubr.bf16.mxu0 0
    %767 = vmatmul.mubr.bf16.gmra.mxu0 %v646
    %v768 = vpop.f32.mrf.mxu0
    %v769 = vadd.f32 %v668, %v768
    %v770 = vpop.f32.mrf.mxu0
    %v771 = vpop.f32.mrf.mxu0
    %v772 = vadd.f32 %v668, %v771
    %v773 = vpop.f32.mrf.mxu0
    %774 = vdwg.mxu0
    %v775 = vtanh.pop %v753
    %v776 = vtanh.pop %v756
    %v777 = vtanh.pop %v761
    %v778 = vtanh.pop %v764
    %v779 = vtanh.pop %v769
    %v780 = vtanh.pop %v772
    %781 = vst [vmem:[#allocation11] sm:$0xff] %v775
    %782 = vst [vmem:[#allocation11 + $0x8] sm:$0xff] %v776
    %783 = vst [vmem:[#allocation11 + $0x10] sm:$0xff] %v777
    %784 = vst [vmem:[#allocation11 + $0x18] sm:$0xff] %v778
    %785 = vst [vmem:[#allocation11 + $0x20] sm:$0xff] %v779
    %786 = vst [vmem:[#allocation11 + $0x28] sm:$0xff] %v780
    // Predicated region
    $region66: #{tpu_custom_call.1} parent=1 // pred_check
      _
    $region67: #{tpu_custom_call.1} parent=1 // pred_check_branch
      %788 = sbr.rel (0) target = $region69
    $region68: #{tpu_custom_call.1} parent=1 // pred_region
      %s790 = ssub.s32 768, 768
      %791 = vsyncadd [#allocation4], %s790
      %s792 = sshll.u32 [#allocation11], 4
      %s793 = int_to_ptr.vmem [resolvable:$true] %s792
      %798 = dma.vmem_to_hbm [thread:$0]  %s793, 768, %s11, [#allocation4], 128, 128, 8
    $region69: #{tpu_custom_call.1} parent=1 // pred_fallthru
      _
    // Predicated region
    $region70: #{tpu_custom_call.1} parent=1 // pred_check
      _
    $region71: #{tpu_custom_call.1} parent=1 // pred_check_branch
      %800 = sbr.rel (0) target = $region73
    $region72: #{tpu_custom_call.1} parent=1 // pred_region
      %801 = dma.done [#allocation4], 768
    $region73: #{tpu_custom_call.1} parent=1 // pred_fallthru
      _
    %802 = vsyncpa [#allocation3], 1
    %803 = vsyncpa [#allocation6], 1
    %804 = vsyncpa [#allocation9], 1
    %805 = vsyncpa [#allocation4], 1

// kernel: tpu_custom_call.1
$region0: #{tpu_custom_call.1}
  #allocation0 [shape = 'u32[]', space=smem, size = 0x4, offset = 0x4, fixed_abs, tag = 'smem constant byte address 0x4 - core index']
  #allocation1 [shape = 'u32[144,128]{1,0:T(1,128)}', space=vmem, size = 0x12000, scoped, tag = 'internal scratch']
  %s0 = inlined_call_operand.hbm [shape: bf16[48,128], index: 0, kind: input, shape index: {}]
  %s1 = inlined_call_operand.hbm [shape: bf16[128,128], index: 1, kind: input, shape index: {}]
  %s2 = inlined_call_operand.vmem [shape: f32[1,128], index: 2, kind: input, shape index: {}]
  %s3 = inlined_call_operand.vmem [shape: f32[1,128], index: 3, kind: input, shape index: {}]
  %s4 = inlined_call_operand.vmem [shape: f32[1,128], index: 4, kind: input, shape index: {}]
  %s5 = inlined_call_operand.hbm [shape: bf16[128,128], index: 5, kind: input, shape index: {}]
  %s6 = inlined_call_operand.vmem [shape: f32[1,128], index: 6, kind: input, shape index: {}]
  %s7 = inlined_call_operand.hbm [shape: bf16[128,128], index: 7, kind: input, shape index: {}]
  %s8 = inlined_call_operand.vmem [shape: f32[1,128], index: 8, kind: input, shape index: {}]
  %s9 = inlined_call_operand.hbm [shape: bf16[128,128], index: 9, kind: input, shape index: {}]
  %s10 = inlined_call_operand.vmem [shape: f32[1,128], index: 10, kind: input, shape index: {}]
  %s11 = inlined_call_operand.hbm [shape: f32[48,128], index: 11, kind: output, shape index: {}]
  %s12 = sld [smem:[#allocation0]]
  $region74: #{tpu_custom_call.1} parent=0
    _
  %s14 = ssub.s32 1, %s12
  %s15 = scalar_select 0, %s14, %s12
  $region1: #{tpu_custom_call.1} parent=0
    #allocation2 [shape = 'u8[12288]{0}', space=vmem, size = 0x3000, scoped, tag = 'input window, operand 0, single buffered']
    #allocation3 [shape = 's32[1]{0}', space=sflag, size = 0x4, scoped, tag = 'scoped memory for tpu_custom_call.1']
    #allocation4 [shape = 's32[1]{0}', space=sflag, size = 0x4, scoped, tag = 'scoped memory for tpu_custom_call.1']
    #allocation5 [shape = 'u8[32768]{0}', space=vmem, size = 0x8000, scoped, tag = 'input window, operand 1, single buffered']
    #allocation6 [shape = 's32[1]{0}', space=sflag, size = 0x4, scoped, tag = 'scoped memory for tpu_custom_call.1']
    #allocation7 [shape = 'u8[32768]{0}', space=vmem, size = 0x8000, scoped, tag = 'input window, operand 5, single buffered']
    #allocation8 [shape = 'u8[32768]{0}', space=vmem, size = 0x8000, scoped, tag = 'input window, operand 7, single buffered']
    #allocation9 [shape = 's32[1]{0}', space=sflag, size = 0x4, scoped, tag = 'scoped memory for tpu_custom_call.1']
    #allocation10 [shape = 'u8[32768]{0}', space=vmem, size = 0x8000, scoped, tag = 'input window, operand 9, single buffered']
    #allocation11 [shape = 'u8[24576]{0}', space=vmem, size = 0x6000, scoped, tag = 'output window, operand 0, single buffered']
    %16 = vsyncpa [#allocation3], 0
    %17 = vsyncpa [#allocation6], 0
    %18 = vsyncpa [#allocation9], 0
    %19 = vsyncpa [#allocation4], 0
    // Predicated region
    $region2: #{tpu_custom_call.1} parent=1 // pred_check
      _
    $region3: #{tpu_custom_call.1} parent=1 // pred_check_branch
      %21 = sbr.rel (0) target = $region5
    $region4: #{tpu_custom_call.1} parent=1 // pred_region
      %s23 = ssub.s32 384, 384
      %24 = vsyncadd [#allocation3], %s23
      %s25 = sshll.u32 [#allocation2], 4
      %s26 = int_to_ptr.vmem [resolvable:$true] %s25
      %31 = dma.hbm_to_vmem [thread:$0]  %s0, 384, %s26, [#allocation3], 64, 64, 4
    $region5: #{tpu_custom_call.1} parent=1 // pred_fallthru
      _
    // Predicated region
    $region6: #{tpu_custom_call.1} parent=1 // pred_check
      _
    $region7: #{tpu_custom_call.1} parent=1 // pred_check_branch
      %33 = sbr.rel (0) target = $region9
    $region8: #{tpu_custom_call.1} parent=1 // pred_region
      %s35 = ssub.s32 1024, 1024
      %36 = vsyncadd [#allocation6], %s35
      %s37 = sshll.u32 [#allocation5], 4
      %s38 = int_to_ptr.vmem [resolvable:$true] %s37
      %43 = dma.hbm_to_vmem [thread:$0]  %s1, 1024, %s38, [#allocation6], 64, 64, 4
    $region9: #{tpu_custom_call.1} parent=1 // pred_fallthru
      _
    // Predicated region
    $region10: #{tpu_custom_call.1} parent=1 // pred_check
      _
    $region11: #{tpu_custom_call.1} parent=1 // pred_check_branch
      %45 = sbr.rel (0) target = $region13
    $region12: #{tpu_custom_call.1} parent=1 // pred_region
      _
    $region13: #{tpu_custom_call.1} parent=1 // pred_fallthru
      _
    // Predicated region
    $region14: #{tpu_custom_call.1} parent=1 // pred_check
      _
    $region15: #{tpu_custom_call.1} parent=1 // pred_check_branch
      %47 = sbr.rel (0) target = $region17
    $region16: #{tpu_custom_call.1} parent=1 // pred_region
      _
    $region17: #{tpu_custom_call.1} parent=1 // pred_fallthru
      _
    // Predicated region
    $region18: #{tpu_custom_call.1} parent=1 // pred_check
      _
    $region19: #{tpu_custom_call.1} parent=1 // pred_check_branch
      %49 = sbr.rel (0) target = $region21
    $region20: #{tpu_custom_call.1} parent=1 // pred_region
      _
    $region21: #{tpu_custom_call.1} parent=1 // pred_fallthru
      _
    // Predicated region
    $region22: #{tpu_custom_call.1} parent=1 // pred_check
      _
    $region23: #{tpu_custom_call.1} parent=1 // pred_check_branch
      %51 = sbr.rel (0) target = $region25
    $region24: #{tpu_custom_call.1} parent=1 // pred_region
      %s53 = ssub.s32 1024, 1024
      %54 = vsyncadd [#allocation6], %s53
      %s55 = sshll.u32 [#allocation7], 4
      %s56 = int_to_ptr.vmem [resolvable:$true] %s55
      %61 = dma.hbm_to_vmem [thread:$0]  %s5, 1024, %s56, [#allocation6], 64, 64, 4
    $region25: #{tpu_custom_call.1} parent=1 // pred_fallthru
      _
    // Predicated region
    $region26: #{tpu_custom_call.1} parent=1 // pred_check
      _
    $region27: #{tpu_custom_call.1} parent=1 // pred_check_branch
      %63 = sbr.rel (0) target = $region29
    $region28: #{tpu_custom_call.1} parent=1 // pred_region
      _
    $region29: #{tpu_custom_call.1} parent=1 // pred_fallthru
      _
    // Predicated region
    $region30: #{tpu_custom_call.1} parent=1 // pred_check
      _
    $region31: #{tpu_custom_call.1} parent=1 // pred_check_branch
      %65 = sbr.rel (0) target = $region33
    $region32: #{tpu_custom_call.1} parent=1 // pred_region
      %s67 = ssub.s32 1024, 1024
      %68 = vsyncadd [#allocation9], %s67
      %s69 = sshll.u32 [#allocation8], 4
      %s70 = int_to_ptr.vmem [resolvable:$true] %s69
      %75 = dma.hbm_to_vmem [thread:$0]  %s7, 1024, %s70, [#allocation9], 64, 64, 4
    $region33: #{tpu_custom_call.1} parent=1 // pred_fallthru
      _
    // Predicated region
    $region34: #{tpu_custom_call.1} parent=1 // pred_check
      _
    $region35: #{tpu_custom_call.1} parent=1 // pred_check_branch
      %77 = sbr.rel (0) target = $region37
    $region36: #{tpu_custom_call.1} parent=1 // pred_region
      _
    $region37: #{tpu_custom_call.1} parent=1 // pred_fallthru
      _
    // Predicated region
    $region38: #{tpu_custom_call.1} parent=1 // pred_check
      _
    $region39: #{tpu_custom_call.1} parent=1 // pred_check_branch
      %79 = sbr.rel (0) target = $region41
    $region40: #{tpu_custom_call.1} parent=1 // pred_region
      %s81 = ssub.s32 1024, 1024
      %82 = vsyncadd [#allocation9], %s81
      %s83 = sshll.u32 [#allocation10], 4
      %s84 = int_to_ptr.vmem [resolvable:$true] %s83
      %89 = dma.hbm_to_vmem [thread:$0]  %s9, 1024, %s84, [#allocation9], 64, 64, 4
    $region41: #{tpu_custom_call.1} parent=1 // pred_fallthru
      _
    // Predicated region
    $region42: #{tpu_custom_call.1} parent=1 // pred_check
      _
    $region43: #{tpu_custom_call.1} parent=1 // pred_check_branch
      %91 = sbr.rel (0) target = $region45
    $region44: #{tpu_custom_call.1} parent=1 // pred_region
      _
    $region45: #{tpu_custom_call.1} parent=1 // pred_fallthru
      _
    // Predicated region
    $region46: #{tpu_custom_call.1} parent=1 // pred_check
      _
    $region47: #{tpu_custom_call.1} parent=1 // pred_check_branch
      %93 = sbr.rel (0) target = $region49
    $region48: #{tpu_custom_call.1} parent=1 // pred_region
      %94 = dma.done [#allocation3], 384
    $region49: #{tpu_custom_call.1} parent=1 // pred_fallthru
      _
    // Predicated region
    $region50: #{tpu_custom_call.1} parent=1 // pred_check
      _
    $region51: #{tpu_custom_call.1} parent=1 // pred_check_branch
      %96 = sbr.rel (0) target = $region53
    $region52: #{tpu_custom_call.1} parent=1 // pred_region
      %97 = dma.done [#allocation6], 1024
    $region53: #{tpu_custom_call.1} parent=1 // pred_fallthru
      _
    // Predicated region
    $region54: #{tpu_custom_call.1} parent=1 // pred_check
      _
    $region55: #{tpu_custom_call.1} parent=1 // pred_check_branch
      %99 = sbr.rel (0) target = $region57
    $region56: #{tpu_custom_call.1} parent=1 // pred_region
      %100 = dma.done [#allocation6], 1024
    $region57: #{tpu_custom_call.1} parent=1 // pred_fallthru
      _
    // Predicated region
    $region58: #{tpu_custom_call.1} parent=1 // pred_check
      _
    $region59: #{tpu_custom_call.1} parent=1 // pred_check_branch
      %102 = sbr.rel (0) target = $region61
    $region60: #{tpu_custom_call.1} parent=1 // pred_region
      %103 = dma.done [#allocation9], 1024
    $region61: #{tpu_custom_call.1} parent=1 // pred_fallthru
      _
    // Predicated region
    $region62: #{tpu_custom_call.1} parent=1 // pred_check
      _
    $region63: #{tpu_custom_call.1} parent=1 // pred_check_branch
      %105 = sbr.rel (0) target = $region65
    $region64: #{tpu_custom_call.1} parent=1 // pred_region
      %106 = dma.done [#allocation9], 1024
    $region65: #{tpu_custom_call.1} parent=1 // pred_fallthru
      _
    %v108 = vld [vmem:[#allocation2] sm:$0xf]
    %v109 = vld [vmem:[#allocation2 + $0x4] sm:$0xf]
    %v110 = vld [vmem:[#allocation2 + $0x8] sm:$0xf]
    %v111 = vld [vmem:[#allocation2 + $0xc] sm:$0xf]
    %v112 = vld [vmem:[#allocation2 + $0x10] sm:$0xf]
    %v113 = vld [vmem:[#allocation2 + $0x14] sm:$0xf]
    %v114 = vld [vmem:[#allocation5] sm:$0xf]
    %v115 = vld [vmem:[#allocation5 + $0x4] sm:$0xf]
    %v116 = vld [vmem:[#allocation5 + $0x8] sm:$0xf]
    %v117 = vld [vmem:[#allocation5 + $0xc] sm:$0xf]
    %v118 = vld [vmem:[#allocation5 + $0x10] sm:$0xf]
    %v119 = vld [vmem:[#allocation5 + $0x14] sm:$0xf]
    %v120 = vld [vmem:[#allocation5 + $0x18] sm:$0xf]
    %v121 = vld [vmem:[#allocation5 + $0x1c] sm:$0xf]
    %v122 = vld [vmem:[#allocation5 + $0x20] sm:$0xf]
    %v123 = vld [vmem:[#allocation5 + $0x24] sm:$0xf]
    %v124 = vld [vmem:[#allocation5 + $0x28] sm:$0xf]
    %v125 = vld [vmem:[#allocation5 + $0x2c] sm:$0xf]
    %v126 = vld [vmem:[#allocation5 + $0x30] sm:$0xf]
    %v127 = vld [vmem:[#allocation5 + $0x34] sm:$0xf]
    %v128 = vld [vmem:[#allocation5 + $0x38] sm:$0xf]
    %v129 = vld [vmem:[#allocation5 + $0x3c] sm:$0xf]
    %v130 = vld [vmem:[%s2] sm:$0x1]
    %v132 = vlaneseq
    %v133 = vshrl.u32 %v132, 7
    %v134 = vsub.s32 0, %v133
    %v135 = vrot.slane %v130, %v134
    %v143 = vunpack.c.l.b16 %v108
    %v144 = vunpack.c.l.b16 %v109
    %v145 = vunpack.c.l.b16 %v110
    %v146 = vunpack.c.l.b16 %v111
    %v147 = vunpack.c.l.b16 %v112
    %v148 = vunpack.c.l.b16 %v113
    %v149 = vpack.c.b16 %v144, %v143
    %v150 = vpack.c.b16 %v146, %v145
    %v151 = vpack.c.b16 %v148, %v147
    %v171 = vunpack.c.l.b16 %v114
    %v172 = vunpack.c.l.b16 %v115
    %v173 = vunpack.c.l.b16 %v116
    %v174 = vunpack.c.l.b16 %v117
    %v175 = vunpack.c.l.b16 %v118
    %v176 = vunpack.c.l.b16 %v119
    %v177 = vunpack.c.l.b16 %v120
    %v178 = vunpack.c.l.b16 %v121
    %v179 = vunpack.c.l.b16 %v122
    %v180 = vunpack.c.l.b16 %v123
    %v181 = vunpack.c.l.b16 %v124
    %v182 = vunpack.c.l.b16 %v125
    %v183 = vunpack.c.l.b16 %v126
    %v184 = vunpack.c.l.b16 %v127
    %v185 = vunpack.c.l.b16 %v128
    %v186 = vunpack.c.l.b16 %v129
    %v187 = vpack.c.b16 %v172, %v171
    %v188 = vpack.c.b16 %v174, %v173
    %v189 = vpack.c.b16 %v176, %v175
    %v190 = vpack.c.b16 %v178, %v177
    %v191 = vpack.c.b16 %v180, %v179
    %v192 = vpack.c.b16 %v182, %v181
    %v193 = vpack.c.b16 %v184, %v183
    %v194 = vpack.c.b16 %v186, %v185
    %203 = vmatprep.subr.bf16.mxu0 0
    %204 = vmatpush1.bf16.msra.mxu0 %v194
    %205 = vmatprep.subr.bf16.mxu0 0
    %206 = vmatpush1.bf16.msra.mxu0 %v193
    %207 = vmatprep.subr.bf16.mxu0 0
    %208 = vmatpush1.bf16.msra.mxu0 %v192
    %209 = vmatprep.subr.bf16.mxu0 0
    %210 = vmatpush1.bf16.msra.mxu0 %v191
    %211 = vmatprep.subr.bf16.mxu0 0
    %212 = vmatpush1.bf16.msra.mxu0 %v190
    %213 = vmatprep.subr.bf16.mxu0 0
    %214 = vmatpush1.bf16.msra.mxu0 %v189
    %215 = vmatprep.subr.bf16.mxu0 0
    %216 = vmatpush1.bf16.msra.mxu0 %v188
    %217 = vmatprep.subr.bf16.mxu0 0
    %218 = vmatpush1.bf16.msra.mxu0 %v187
    %219 = vmatprep.subr.bf16.mxu0 0
    %220 = vmatpush2.bf16.msra.mxu0 0
    %221 = vmatprep.subr.bf16.mxu0 0
    %222 = vmatpush2.bf16.msra.mxu0 0
    %223 = vmatprep.subr.bf16.mxu0 0
    %224 = vmatpush2.bf16.msra.mxu0 0
    %225 = vmatprep.subr.bf16.mxu0 0
    %226 = vmatpush2.bf16.msra.mxu0 0
    %227 = vmatprep.subr.bf16.mxu0 0
    %228 = vmatpush2.bf16.msra.mxu0 0
    %229 = vmatprep.subr.bf16.mxu0 0
    %230 = vmatpush2.bf16.msra.mxu0 0
    %231 = vmatprep.subr.bf16.mxu0 0
    %232 = vmatpush2.bf16.msra.mxu0 0
    %233 = vmatprep.subr.bf16.mxu0 0
    %234 = vmatpush2.bf16.msra.mxu0 0
    %235 = vmatprep.mubr.bf16.mxu0 0
    %236 = vmatmul.mubr.bf16.gmra.mxu0 %v149
    %v237 = vpop.f32.mrf.mxu0
    %v238 = vadd.f32 %v135, %v237
    %v239 = vpop.f32.mrf.mxu0
    %v240 = vpop.f32.mrf.mxu0
    %v241 = vadd.f32 %v135, %v240
    %v242 = vpop.f32.mrf.mxu0
    %243 = vmatprep.mubr.bf16.mxu0 0
    %244 = vmatmul.mubr.bf16.gmra.mxu0 %v150
    %v245 = vpop.f32.mrf.mxu0
    %v246 = vadd.f32 %v135, %v245
    %v247 = vpop.f32.mrf.mxu0
    %v248 = vpop.f32.mrf.mxu0
    %v249 = vadd.f32 %v135, %v248
    %v250 = vpop.f32.mrf.mxu0
    %251 = vmatprep.mubr.bf16.mxu0 0
    %252 = vmatmul.mubr.bf16.gmra.mxu0 %v151
    %v253 = vpop.f32.mrf.mxu0
    %v254 = vadd.f32 %v135, %v253
    %v255 = vpop.f32.mrf.mxu0
    %v256 = vpop.f32.mrf.mxu0
    %v257 = vadd.f32 %v135, %v256
    %v258 = vpop.f32.mrf.mxu0
    %259 = vdwg.mxu0
    %260 = vadd.xlane.f32.xlu0 %v238
    %v261 = vpop.xlane.xlu0 %260
    %262 = vadd.xlane.f32.xlu0 %v241
    %v263 = vpop.xlane.xlu0 %262
    %264 = vadd.xlane.f32.xlu0 %v246
    %v265 = vpop.xlane.xlu0 %264
    %266 = vadd.xlane.f32.xlu0 %v249
    %v267 = vpop.xlane.xlu0 %266
    %268 = vadd.xlane.f32.xlu0 %v254
    %v269 = vpop.xlane.xlu0 %268
    %270 = vadd.xlane.f32.xlu0 %v257
    %v271 = vpop.xlane.xlu0 %270
    %v272 = vmul.f32 %v261, 0.02
    %v273 = vmul.f32 %v263, 0.02
    %v274 = vmul.f32 %v265, 0.02
    %v275 = vmul.f32 %v267, 0.02
    %v276 = vmul.f32 %v269, 0.02
    %v277 = vmul.f32 %v271, 0.02
    %v278 = vmul.f32 %v238, %v238
    %v279 = vmul.f32 %v241, %v241
    %v280 = vmul.f32 %v246, %v246
    %v281 = vmul.f32 %v249, %v249
    %v282 = vmul.f32 %v254, %v254
    %v283 = vmul.f32 %v257, %v257
    %284 = vadd.xlane.f32.xlu0 %v278
    %v285 = vpop.xlane.xlu0 %284
    %286 = vadd.xlane.f32.xlu0 %v279
    %v287 = vpop.xlane.xlu0 %286
    %288 = vadd.xlane.f32.xlu0 %v280
    %v289 = vpop.xlane.xlu0 %288
    %290 = vadd.xlane.f32.xlu0 %v281
    %v291 = vpop.xlane.xlu0 %290
    %292 = vadd.xlane.f32.xlu0 %v282
    %v293 = vpop.xlane.xlu0 %292
    %294 = vadd.xlane.f32.xlu0 %v283
    %v295 = vpop.xlane.xlu0 %294
    %v296 = vmul.f32 %v285, 0.02
    %v297 = vmul.f32 %v287, 0.02
    %v298 = vmul.f32 %v289, 0.02
    %v299 = vmul.f32 %v291, 0.02
    %v300 = vmul.f32 %v293, 0.02
    %v301 = vmul.f32 %v295, 0.02
    %v302 = vmul.f32 %v272, %v272
    %v303 = vmul.f32 %v273, %v273
    %v304 = vmul.f32 %v274, %v274
    %v305 = vmul.f32 %v275, %v275
    %v306 = vmul.f32 %v276, %v276
    %v307 = vmul.f32 %v277, %v277
    %v308 = vsub.f32 %v296, %v302
    %v309 = vsub.f32 %v297, %v303
    %v310 = vsub.f32 %v298, %v304
    %v311 = vsub.f32 %v299, %v305
    %v312 = vsub.f32 %v300, %v306
    %v313 = vsub.f32 %v301, %v307
    %v314 = vsub.f32 %v238, %v272
    %v315 = vsub.f32 %v241, %v273
    %v316 = vsub.f32 %v246, %v274
    %v317 = vsub.f32 %v249, %v275
    %v318 = vsub.f32 %v254, %v276
    %v319 = vsub.f32 %v257, %v277
    %v320 = vadd.f32 %v308, 1e-05
    %v321 = vadd.f32 %v309, 1e-05
    %v322 = vadd.f32 %v310, 1e-05
    %v323 = vadd.f32 %v311, 1e-05
    %v324 = vadd.f32 %v312, 1e-05
    %v325 = vadd.f32 %v313, 1e-05
    %v326 = vrsqrt.pop %v320
    %v327 = vrsqrt.pop %v321
    %v328 = vrsqrt.pop %v322
    %v329 = vrsqrt.pop %v323
    %v330 = vrsqrt.pop %v324
    %v331 = vrsqrt.pop %v325
    %v332 = vmul.f32 %v314, %v326
    %v333 = vmul.f32 %v315, %v327
    %v334 = vmul.f32 %v316, %v328
    %v335 = vmul.f32 %v317, %v329
    %v336 = vmul.f32 %v318, %v330
    %v337 = vmul.f32 %v319, %v331
    %v338 = vld [vmem:[%s3] sm:$0x1]
    %v340 = vlaneseq
    %v341 = vshrl.u32 %v340, 7
    %v342 = vsub.s32 0, %v341
    %v343 = vrot.slane %v338, %v342
    %v345 = vmul.f32 %v332, %v343
    %v346 = vmul.f32 %v333, %v343
    %v347 = vmul.f32 %v334, %v343
    %v348 = vmul.f32 %v335, %v343
    %v349 = vmul.f32 %v336, %v343
    %v350 = vmul.f32 %v337, %v343
    %v351 = vld [vmem:[%s4] sm:$0x1]
    %v353 = vlaneseq
    %v354 = vshrl.u32 %v353, 7
    %v355 = vsub.s32 0, %v354
    %v356 = vrot.slane %v351, %v355
    %v358 = vadd.f32 %v345, %v356
    %v359 = vadd.f32 %v346, %v356
    %v360 = vadd.f32 %v347, %v356
    %v361 = vadd.f32 %v348, %v356
    %v362 = vadd.f32 %v349, %v356
    %v363 = vadd.f32 %v350, %v356
    %v364 = vtanh.pop %v358
    %v365 = vtanh.pop %v359
    %v366 = vtanh.pop %v360
    %v367 = vtanh.pop %v361
    %v368 = vtanh.pop %v362
    %v369 = vtanh.pop %v363
    %v370 = vpack.c.bf16 %v365, %v364
    %v371 = vpack.c.bf16 %v367, %v366
    %v372 = vpack.c.bf16 %v369, %v368
    %v373 = vld [vmem:[#allocation7] sm:$0xf]
    %v374 = vld [vmem:[#allocation7 + $0x4] sm:$0xf]
    %v375 = vld [vmem:[#allocation7 + $0x8] sm:$0xf]
    %v376 = vld [vmem:[#allocation7 + $0xc] sm:$0xf]
    %v377 = vld [vmem:[#allocation7 + $0x10] sm:$0xf]
    %v378 = vld [vmem:[#allocation7 + $0x14] sm:$0xf]
    %v379 = vld [vmem:[#allocation7 + $0x18] sm:$0xf]
    %v380 = vld [vmem:[#allocation7 + $0x1c] sm:$0xf]
    %v381 = vld [vmem:[#allocation7 + $0x20] sm:$0xf]
    %v382 = vld [vmem:[#allocation7 + $0x24] sm:$0xf]
    %v383 = vld [vmem:[#allocation7 + $0x28] sm:$0xf]
    %v384 = vld [vmem:[#allocation7 + $0x2c] sm:$0xf]
    %v385 = vld [vmem:[#allocation7 + $0x30] sm:$0xf]
    %v386 = vld [vmem:[#allocation7 + $0x34] sm:$0xf]
    %v387 = vld [vmem:[#allocation7 + $0x38] sm:$0xf]
    %v388 = vld [vmem:[#allocation7 + $0x3c] sm:$0xf]
    %v389 = vld [vmem:[%s6] sm:$0x1]
    %v391 = vlaneseq
    %v392 = vshrl.u32 %v391, 7
    %v393 = vsub.s32 0, %v392
    %v394 = vrot.slane %v389, %v393
    %v412 = vunpack.c.l.b16 %v373
    %v413 = vunpack.c.l.b16 %v374
    %v414 = vunpack.c.l.b16 %v375
    %v415 = vunpack.c.l.b16 %v376
    %v416 = vunpack.c.l.b16 %v377
    %v417 = vunpack.c.l.b16 %v378
    %v418 = vunpack.c.l.b16 %v379
    %v419 = vunpack.c.l.b16 %v380
    %v420 = vunpack.c.l.b16 %v381
    %v421 = vunpack.c.l.b16 %v382
    %v422 = vunpack.c.l.b16 %v383
    %v423 = vunpack.c.l.b16 %v384
    %v424 = vunpack.c.l.b16 %v385
    %v425 = vunpack.c.l.b16 %v386
    %v426 = vunpack.c.l.b16 %v387
    %v427 = vunpack.c.l.b16 %v388
    %v428 = vpack.c.b16 %v413, %v412
    %v429 = vpack.c.b16 %v415, %v414
    %v430 = vpack.c.b16 %v417, %v416
    %v431 = vpack.c.b16 %v419, %v418
    %v432 = vpack.c.b16 %v421, %v420
    %v433 = vpack.c.b16 %v423, %v422
    %v434 = vpack.c.b16 %v425, %v424
    %v435 = vpack.c.b16 %v427, %v426
    %444 = vmatprep.subr.bf16.mxu0 0
    %445 = vmatpush1.bf16.msra.mxu0 %v435
    %446 = vmatprep.subr.bf16.mxu0 0
    %447 = vmatpush1.bf16.msra.mxu0 %v434
    %448 = vmatprep.subr.bf16.mxu0 0
    %449 = vmatpush1.bf16.msra.mxu0 %v433
    %450 = vmatprep.subr.bf16.mxu0 0
    %451 = vmatpush1.bf16.msra.mxu0 %v432
    %452 = vmatprep.subr.bf16.mxu0 0
    %453 = vmatpush1.bf16.msra.mxu0 %v431
    %454 = vmatprep.subr.bf16.mxu0 0
    %455 = vmatpush1.bf16.msra.mxu0 %v430
    %456 = vmatprep.subr.bf16.mxu0 0
    %457 = vmatpush1.bf16.msra.mxu0 %v429
    %458 = vmatprep.subr.bf16.mxu0 0
    %459 = vmatpush1.bf16.msra.mxu0 %v428
    %460 = vmatprep.subr.bf16.mxu0 0
    %461 = vmatpush2.bf16.msra.mxu0 0
    %462 = vmatprep.subr.bf16.mxu0 0
    %463 = vmatpush2.bf16.msra.mxu0 0
    %464 = vmatprep.subr.bf16.mxu0 0
    %465 = vmatpush2.bf16.msra.mxu0 0
    %466 = vmatprep.subr.bf16.mxu0 0
    %467 = vmatpush2.bf16.msra.mxu0 0
    %468 = vmatprep.subr.bf16.mxu0 0
    %469 = vmatpush2.bf16.msra.mxu0 0
    %470 = vmatprep.subr.bf16.mxu0 0
    %471 = vmatpush2.bf16.msra.mxu0 0
    %472 = vmatprep.subr.bf16.mxu0 0
    %473 = vmatpush2.bf16.msra.mxu0 0
    %474 = vmatprep.subr.bf16.mxu0 0
    %475 = vmatpush2.bf16.msra.mxu0 0
    %476 = vmatprep.mubr.bf16.mxu0 0
    %477 = vmatmul.mubr.bf16.gmra.mxu0 %v370
    %v478 = vpop.f32.mrf.mxu0
    %v479 = vadd.f32 %v394, %v478
    %v480 = vpop.f32.mrf.mxu0
    %v481 = vpop.f32.mrf.mxu0
    %v482 = vadd.f32 %v394, %v481
    %v483 = vpop.f32.mrf.mxu0
    %484 = vmatprep.mubr.bf16.mxu0 0
    %485 = vmatmul.mubr.bf16.gmra.mxu0 %v371
    %v486 = vpop.f32.mrf.mxu0
    %v487 = vadd.f32 %v394, %v486
    %v488 = vpop.f32.mrf.mxu0
    %v489 = vpop.f32.mrf.mxu0
    %v490 = vadd.f32 %v394, %v489
    %v491 = vpop.f32.mrf.mxu0
    %492 = vmatprep.mubr.bf16.mxu0 0
    %493 = vmatmul.mubr.bf16.gmra.mxu0 %v372
    %v494 = vpop.f32.mrf.mxu0
    %v495 = vadd.f32 %v394, %v494
    %v496 = vpop.f32.mrf.mxu0
    %v497 = vpop.f32.mrf.mxu0
    %v498 = vadd.f32 %v394, %v497
    %v499 = vpop.f32.mrf.mxu0
    %500 = vdwg.mxu0
    %v501 = vmax.f32 %v479, 0.0
    %v502 = vmax.f32 %v482, 0.0
    %v503 = vmax.f32 %v487, 0.0
    %v504 = vmax.f32 %v490, 0.0
    %v505 = vmax.f32 %v495, 0.0
    %v506 = vmax.f32 %v498, 0.0
    %v507 = vpack.c.bf16 %v502, %v501
    %v508 = vpack.c.bf16 %v504, %v503
    %v509 = vpack.c.bf16 %v506, %v505
    %v510 = vld [vmem:[#allocation8] sm:$0xf]
    %v511 = vld [vmem:[#allocation8 + $0x4] sm:$0xf]
    %v512 = vld [vmem:[#allocation8 + $0x8] sm:$0xf]
    %v513 = vld [vmem:[#allocation8 + $0xc] sm:$0xf]
    %v514 = vld [vmem:[#allocation8 + $0x10] sm:$0xf]
    %v515 = vld [vmem:[#allocation8 + $0x14] sm:$0xf]
    %v516 = vld [vmem:[#allocation8 + $0x18] sm:$0xf]
    %v517 = vld [vmem:[#allocation8 + $0x1c] sm:$0xf]
    %v518 = vld [vmem:[#allocation8 + $0x20] sm:$0xf]
    %v519 = vld [vmem:[#allocation8 + $0x24] sm:$0xf]
    %v520 = vld [vmem:[#allocation8 + $0x28] sm:$0xf]
    %v521 = vld [vmem:[#allocation8 + $0x2c] sm:$0xf]
    %v522 = vld [vmem:[#allocation8 + $0x30] sm:$0xf]
    %v523 = vld [vmem:[#allocation8 + $0x34] sm:$0xf]
    %v524 = vld [vmem:[#allocation8 + $0x38] sm:$0xf]
    %v525 = vld [vmem:[#allocation8 + $0x3c] sm:$0xf]
    %v526 = vld [vmem:[%s8] sm:$0x1]
    %v528 = vlaneseq
    %v529 = vshrl.u32 %v528, 7
    %v530 = vsub.s32 0, %v529
    %v531 = vrot.slane %v526, %v530
    %v549 = vunpack.c.l.b16 %v510
    %v550 = vunpack.c.l.b16 %v511
    %v551 = vunpack.c.l.b16 %v512
    %v552 = vunpack.c.l.b16 %v513
    %v553 = vunpack.c.l.b16 %v514
    %v554 = vunpack.c.l.b16 %v515
    %v555 = vunpack.c.l.b16 %v516
    %v556 = vunpack.c.l.b16 %v517
    %v557 = vunpack.c.l.b16 %v518
    %v558 = vunpack.c.l.b16 %v519
    %v559 = vunpack.c.l.b16 %v520
    %v560 = vunpack.c.l.b16 %v521
    %v561 = vunpack.c.l.b16 %v522
    %v562 = vunpack.c.l.b16 %v523
    %v563 = vunpack.c.l.b16 %v524
    %v564 = vunpack.c.l.b16 %v525
    %v565 = vpack.c.b16 %v550, %v549
    %v566 = vpack.c.b16 %v552, %v551
    %v567 = vpack.c.b16 %v554, %v553
    %v568 = vpack.c.b16 %v556, %v555
    %v569 = vpack.c.b16 %v558, %v557
    %v570 = vpack.c.b16 %v560, %v559
    %v571 = vpack.c.b16 %v562, %v561
    %v572 = vpack.c.b16 %v564, %v563
    %581 = vmatprep.subr.bf16.mxu0 0
    %582 = vmatpush1.bf16.msra.mxu0 %v572
    %583 = vmatprep.subr.bf16.mxu0 0
    %584 = vmatpush1.bf16.msra.mxu0 %v571
    %585 = vmatprep.subr.bf16.mxu0 0
    %586 = vmatpush1.bf16.msra.mxu0 %v570
    %587 = vmatprep.subr.bf16.mxu0 0
    %588 = vmatpush1.bf16.msra.mxu0 %v569
    %589 = vmatprep.subr.bf16.mxu0 0
    %590 = vmatpush1.bf16.msra.mxu0 %v568
    %591 = vmatprep.subr.bf16.mxu0 0
    %592 = vmatpush1.bf16.msra.mxu0 %v567
    %593 = vmatprep.subr.bf16.mxu0 0
    %594 = vmatpush1.bf16.msra.mxu0 %v566
    %595 = vmatprep.subr.bf16.mxu0 0
    %596 = vmatpush1.bf16.msra.mxu0 %v565
    %597 = vmatprep.subr.bf16.mxu0 0
    %598 = vmatpush2.bf16.msra.mxu0 0
    %599 = vmatprep.subr.bf16.mxu0 0
    %600 = vmatpush2.bf16.msra.mxu0 0
    %601 = vmatprep.subr.bf16.mxu0 0
    %602 = vmatpush2.bf16.msra.mxu0 0
    %603 = vmatprep.subr.bf16.mxu0 0
    %604 = vmatpush2.bf16.msra.mxu0 0
    %605 = vmatprep.subr.bf16.mxu0 0
    %606 = vmatpush2.bf16.msra.mxu0 0
    %607 = vmatprep.subr.bf16.mxu0 0
    %608 = vmatpush2.bf16.msra.mxu0 0
    %609 = vmatprep.subr.bf16.mxu0 0
    %610 = vmatpush2.bf16.msra.mxu0 0
    %611 = vmatprep.subr.bf16.mxu0 0
    %612 = vmatpush2.bf16.msra.mxu0 0
    %613 = vmatprep.mubr.bf16.mxu0 0
    %614 = vmatmul.mubr.bf16.gmra.mxu0 %v507
    %v615 = vpop.f32.mrf.mxu0
    %v616 = vadd.f32 %v531, %v615
    %v617 = vpop.f32.mrf.mxu0
    %v618 = vpop.f32.mrf.mxu0
    %v619 = vadd.f32 %v531, %v618
    %v620 = vpop.f32.mrf.mxu0
    %621 = vmatprep.mubr.bf16.mxu0 0
    %622 = vmatmul.mubr.bf16.gmra.mxu0 %v508
    %v623 = vpop.f32.mrf.mxu0
    %v624 = vadd.f32 %v531, %v623
    %v625 = vpop.f32.mrf.mxu0
    %v626 = vpop.f32.mrf.mxu0
    %v627 = vadd.f32 %v531, %v626
    %v628 = vpop.f32.mrf.mxu0
    %629 = vmatprep.mubr.bf16.mxu0 0
    %630 = vmatmul.mubr.bf16.gmra.mxu0 %v509
    %v631 = vpop.f32.mrf.mxu0
    %v632 = vadd.f32 %v531, %v631
    %v633 = vpop.f32.mrf.mxu0
    %v634 = vpop.f32.mrf.mxu0
    %v635 = vadd.f32 %v531, %v634
    %v636 = vpop.f32.mrf.mxu0
    %637 = vdwg.mxu0
    %v638 = vmax.f32 %v616, 0.0
    %v639 = vmax.f32 %v619, 0.0
    %v640 = vmax.f32 %v624, 0.0
    %v641 = vmax.f32 %v627, 0.0
    %v642 = vmax.f32 %v632, 0.0
    %v643 = vmax.f32 %v635, 0.0
    %v644 = vpack.c.bf16 %v639, %v638
    %v645 = vpack.c.bf16 %v641, %v640
    %v646 = vpack.c.bf16 %v643, %v642
    %v647 = vld [vmem:[#allocation10] sm:$0xf]
    %v648 = vld [vmem:[#allocation10 + $0x4] sm:$0xf]
    %v649 = vld [vmem:[#allocation10 + $0x8] sm:$0xf]
    %v650 = vld [vmem:[#allocation10 + $0xc] sm:$0xf]
    %v651 = vld [vmem:[#allocation10 + $0x10] sm:$0xf]
    %v652 = vld [vmem:[#allocation10 + $0x14] sm:$0xf]
    %v653 = vld [vmem:[#allocation10 + $0x18] sm:$0xf]
    %v654 = vld [vmem:[#allocation10 + $0x1c] sm:$0xf]
    %v655 = vld [vmem:[#allocation10 + $0x20] sm:$0xf]
    %v656 = vld [vmem:[#allocation10 + $0x24] sm:$0xf]
    %v657 = vld [vmem:[#allocation10 + $0x28] sm:$0xf]
    %v658 = vld [vmem:[#allocation10 + $0x2c] sm:$0xf]
    %v659 = vld [vmem:[#allocation10 + $0x30] sm:$0xf]
    %v660 = vld [vmem:[#allocation10 + $0x34] sm:$0xf]
    %v661 = vld [vmem:[#allocation10 + $0x38] sm:$0xf]
    %v662 = vld [vmem:[#allocation10 + $0x3c] sm:$0xf]
    %v663 = vld [vmem:[%s10] sm:$0x1]
    %v665 = vlaneseq
    %v666 = vshrl.u32 %v665, 7
    %v667 = vsub.s32 0, %v666
    %v668 = vrot.slane %v663, %v667
    %v686 = vunpack.c.l.b16 %v647
    %v687 = vunpack.c.l.b16 %v648
    %v688 = vunpack.c.l.b16 %v649
    %v689 = vunpack.c.l.b16 %v650
    %v690 = vunpack.c.l.b16 %v651
    %v691 = vunpack.c.l.b16 %v652
    %v692 = vunpack.c.l.b16 %v653
    %v693 = vunpack.c.l.b16 %v654
    %v694 = vunpack.c.l.b16 %v655
    %v695 = vunpack.c.l.b16 %v656
    %v696 = vunpack.c.l.b16 %v657
    %v697 = vunpack.c.l.b16 %v658
    %v698 = vunpack.c.l.b16 %v659
    %v699 = vunpack.c.l.b16 %v660
    %v700 = vunpack.c.l.b16 %v661
    %v701 = vunpack.c.l.b16 %v662
    %v702 = vpack.c.b16 %v687, %v686
    %v703 = vpack.c.b16 %v689, %v688
    %v704 = vpack.c.b16 %v691, %v690
    %v705 = vpack.c.b16 %v693, %v692
    %v706 = vpack.c.b16 %v695, %v694
    %v707 = vpack.c.b16 %v697, %v696
    %v708 = vpack.c.b16 %v699, %v698
    %v709 = vpack.c.b16 %v701, %v700
    %718 = vmatprep.subr.bf16.mxu0 0
    %719 = vmatpush1.bf16.msra.mxu0 %v709
    %720 = vmatprep.subr.bf16.mxu0 0
    %721 = vmatpush1.bf16.msra.mxu0 %v708
    %722 = vmatprep.subr.bf16.mxu0 0
    %723 = vmatpush1.bf16.msra.mxu0 %v707
    %724 = vmatprep.subr.bf16.mxu0 0
    %725 = vmatpush1.bf16.msra.mxu0 %v706
    %726 = vmatprep.subr.bf16.mxu0 0
    %727 = vmatpush1.bf16.msra.mxu0 %v705
    %728 = vmatprep.subr.bf16.mxu0 0
    %729 = vmatpush1.bf16.msra.mxu0 %v704
    %730 = vmatprep.subr.bf16.mxu0 0
    %731 = vmatpush1.bf16.msra.mxu0 %v703
    %732 = vmatprep.subr.bf16.mxu0 0
    %733 = vmatpush1.bf16.msra.mxu0 %v702
    %734 = vmatprep.subr.bf16.mxu0 0
    %735 = vmatpush2.bf16.msra.mxu0 0
    %736 = vmatprep.subr.bf16.mxu0 0
    %737 = vmatpush2.bf16.msra.mxu0 0
    %738 = vmatprep.subr.bf16.mxu0 0
    %739 = vmatpush2.bf16.msra.mxu0 0
    %740 = vmatprep.subr.bf16.mxu0 0
    %741 = vmatpush2.bf16.msra.mxu0 0
    %742 = vmatprep.subr.bf16.mxu0 0
    %743 = vmatpush2.bf16.msra.mxu0 0
    %744 = vmatprep.subr.bf16.mxu0 0
    %745 = vmatpush2.bf16.msra.mxu0 0
    %746 = vmatprep.subr.bf16.mxu0 0
    %747 = vmatpush2.bf16.msra.mxu0 0
    %748 = vmatprep.subr.bf16.mxu0 0
    %749 = vmatpush2.bf16.msra.mxu0 0
    %750 = vmatprep.mubr.bf16.mxu0 0
    %751 = vmatmul.mubr.bf16.gmra.mxu0 %v644
    %v752 = vpop.f32.mrf.mxu0
    %v753 = vadd.f32 %v668, %v752
    %v754 = vpop.f32.mrf.mxu0
    %v755 = vpop.f32.mrf.mxu0
    %v756 = vadd.f32 %v668, %v755
    %v757 = vpop.f32.mrf.mxu0
    %758 = vmatprep.mubr.bf16.mxu0 0
    %759 = vmatmul.mubr.bf16.gmra.mxu0 %v645
    %v760 = vpop.f32.mrf.mxu0
    %v761 = vadd.f32 %v668, %v760
    %v762 = vpop.f32.mrf.mxu0
    %v763 = vpop.f32.mrf.mxu0
    %v764 = vadd.f32 %v668, %v763
    %v765 = vpop.f32.mrf.mxu0
    %766 = vmatprep.mubr.bf16.mxu0 0
    %767 = vmatmul.mubr.bf16.gmra.mxu0 %v646
    %v768 = vpop.f32.mrf.mxu0
    %v769 = vadd.f32 %v668, %v768
    %v770 = vpop.f32.mrf.mxu0
    %v771 = vpop.f32.mrf.mxu0
    %v772 = vadd.f32 %v668, %v771
    %v773 = vpop.f32.mrf.mxu0
    %774 = vdwg.mxu0
    %v775 = vtanh.pop %v753
    %v776 = vtanh.pop %v756
    %v777 = vtanh.pop %v761
    %v778 = vtanh.pop %v764
    %v779 = vtanh.pop %v769
    %v780 = vtanh.pop %v772
    %781 = vst [vmem:[#allocation11] sm:$0xff] %v775
    %782 = vst [vmem:[#allocation11 + $0x8] sm:$0xff] %v776
    %783 = vst [vmem:[#allocation11 + $0x10] sm:$0xff] %v777
    %784 = vst [vmem:[#allocation11 + $0x18] sm:$0xff] %v778
    %785 = vst [vmem:[#allocation11 + $0x20] sm:$0xff] %v779
    %786 = vst [vmem:[#allocation11 + $0x28] sm:$0xff] %v780
    // Predicated region
    $region66: #{tpu_custom_call.1} parent=1 // pred_check
      _
    $region67: #{tpu_custom_call.1} parent=1 // pred_check_branch
      %788 = sbr.rel (0) target = $region69
    $region68: #{tpu_custom_call.1} parent=1 // pred_region
      %s790 = ssub.s32 768, 768
      %791 = vsyncadd [#allocation4], %s790
      %s792 = sshll.u32 [#allocation11], 4
      %s793 = int_to_ptr.vmem [resolvable:$true] %s792
      %798 = dma.vmem_to_hbm [thread:$0]  %s793, 768, %s11, [#allocation4], 128, 128, 8
    $region69: #{tpu_custom_call.1} parent=1 // pred_fallthru
      _
    // Predicated region
    $region70: #{tpu_custom_call.1} parent=1 // pred_check
      _
    $region71: #{tpu_custom_call.1} parent=1 // pred_check_branch
      %800 = sbr.rel (0) target = $region73
    $region72: #{tpu_custom_call.1} parent=1 // pred_region
      %801 = dma.done [#allocation4], 768
    $region73: #{tpu_custom_call.1} parent=1 // pred_fallthru
      _
    %802 = vsyncpa [#allocation3], 1
    %803 = vsyncpa [#allocation6], 1
    %804 = vsyncpa [#allocation9], 1
    %805 = vsyncpa [#allocation4], 1

</llo_original>
